<compile_context>
chip_gen: v6e
topology: v6e:2x2x1
jax: 0.10.0
libtpu: 0.0.40
codegen_flags: <defaults>
</compile_context>

<pallas_src>
import functools

import jax
import jax.numpy as jnp
from jax.experimental import pallas as pl
from jax.experimental.pallas import tpu as pltpu


# ---------------------------------------------------------------------------
# Kernel 1: QKV projection, tiled over (batch, q-tile, head).
# One fused (TQ, C) @ (C, 3*hd) matmul per step; q columns are pre-scaled.
# ---------------------------------------------------------------------------
def _qkv_proj_kernel(x_ref, w_ref, q_ref, k_ref, v_ref, *, head_dim):
    # x_ref: (1, TQ, C); w_ref: (1, C, 3*hd); outputs: (1, 1, TQ, hd)
    xw = jnp.dot(x_ref[0], w_ref[0],
                 preferred_element_type=jnp.float32)          # (TQ, 3*hd)
    q_ref[0, 0] = xw[:, :head_dim].astype(q_ref.dtype)
    k_ref[0, 0] = xw[:, head_dim:2 * head_dim].astype(k_ref.dtype)
    v_ref[0, 0] = xw[:, 2 * head_dim:].astype(v_ref.dtype)


# ---------------------------------------------------------------------------
# Kernel 2: fused flash attention (online softmax) + output projection.
# grid = (B, num_q_tiles, H, num_kv_tiles); head and KV axes are inner
# "arbitrary" reduction axes. Per-head softmax state (m, l, acc) lives in VMEM
# scratch, the (TQ, C) projection accumulator is carried across heads, and the
# projection weight (H, hd, C) is VMEM-resident (constant index_map).
# ---------------------------------------------------------------------------
def _flash_attn_proj_kernel(q_ref, k_ref, v_ref, w_ref, b_ref, o_ref,
                            m_ref, l_ref, acc_ref, oacc_ref):
    h = pl.program_id(2)
    ki = pl.program_id(3)
    nh = pl.num_programs(2)
    nk = pl.num_programs(3)

    @pl.when(jnp.logical_and(h == 0, ki == 0))
    def _():
        oacc_ref[...] = jnp.zeros(oacc_ref.shape, dtype=oacc_ref.dtype)

    @pl.when(ki == 0)
    def _():
        m_ref[...] = jnp.full(m_ref.shape, -jnp.inf, dtype=m_ref.dtype)
        l_ref[...] = jnp.zeros(l_ref.shape, dtype=l_ref.dtype)
        acc_ref[...] = jnp.zeros(acc_ref.shape, dtype=acc_ref.dtype)

    q = q_ref[0, 0]                                            # (TQ, hd), pre-scaled
    k = k_ref[0, 0]                                            # (TK, hd)
    v = v_ref[0, 0]                                            # (TK, hd)

    # q @ k^T without materializing a transpose (scale already folded into q).
    s = jax.lax.dot_general(q, k, (((1,), (1,)), ((), ())),
                            preferred_element_type=jnp.float32)  # (TQ, TK)

    m_prev = m_ref[...]                                        # (TQ, 1)
    m_new = jnp.maximum(m_prev, jnp.max(s, axis=-1, keepdims=True))
    alpha = jnp.exp(m_prev - m_new)
    p = jnp.exp(s - m_new)                                     # (TQ, TK)

    l_ref[...] = alpha * l_ref[...] + jnp.sum(p, axis=-1, keepdims=True)
    acc_ref[...] = alpha * acc_ref[...] + jnp.dot(
        p.astype(v.dtype), v, preferred_element_type=jnp.float32)
    m_ref[...] = m_new

    @pl.when(ki == nk - 1)
    def _():
        # Normalize once per head (attn_drop == identity in eval mode) and fold
        # this head's contribution into the output projection accumulator.
        inv_l = pl.reciprocal(l_ref[...], approx=True)         # EUP slot
        ctx = (acc_ref[...] * inv_l).astype(w_ref.dtype)       # (TQ, hd)
        oacc_ref[...] += jnp.dot(ctx, w_ref[h],
                                 preferred_element_type=jnp.float32)

    @pl.when(jnp.logical_and(h == nh - 1, ki == nk - 1))
    def _():
        # Lane-dense (TQ, C) store; proj_drop == identity in eval mode.
        o_ref[0] = (oacc_ref[...] + b_ref[...]).astype(o_ref.dtype)


def _pick_tile(n, pref):
    """Largest tile <= pref that divides n (prefer 8-aligned); never exceeds
    pref unless n itself is <= pref (avoids full-N score tiles for large N)."""
    if n <= pref:
        return n
    for t in range(pref, 7, -1):
        if n % t == 0 and t % 8 == 0:
            return t
    # TODO(synk): for awkward N with no 8-aligned divisor <= pref, a padded +
    # masked grid (pl.cdiv) would be needed; fall back to the largest divisor.
    for t in range(pref, 0, -1):
        if n % t == 0:
            return t
    return n


def prepare_attention_params(wqkv_t, wproj_t, bproj, *, num_heads):
    """One-time weight re-layout (hoisted out of the per-call hot path).

    wqkv_t:  [C, 3C]  pre-transposed qkv Linear weight (x @ wqkv_t == qkv(x)).
    wproj_t: [C, C]   pre-transposed proj Linear weight.
    bproj:   [1, C]   proj bias.

    Returns:
      w_qkv:  (H, C, 3*hd) per-head [q | k | v] columns; q pre-scaled by hd^-0.5.
      w_proj: (H, hd, C)
      bias:   (1, C)
    """
    C = wqkv_t.shape[0]
    H = num_heads
    hd = C // H
    scale = hd ** (-0.5)

    # qkv(x).reshape(B,N,3,H,hd): output column index = s*C + h*hd + d.
    w4 = wqkv_t.reshape(C, 3, H, hd)               # [c_in, s, h, d]
    w4 = jnp.transpose(w4, (2, 0, 1, 3))           # (H, C, 3, hd)
    wq = w4[:, :, 0, :] * scale                    # fold softmax scale into Q
    wk = w4[:, :, 1, :]
    wv = w4[:, :, 2, :]
    w_qkv = jnp.concatenate([wq, wk, wv], axis=-1)  # (H, C, 3*hd)

    w_proj = wproj_t.reshape(H, hd, C)
    bias = bproj.reshape(1, C)
    return w_qkv, w_proj, bias


def attention_pallas(x, w_qkv, w_proj, bias, *, num_heads,
                     q_tile=256, kv_tile=256):
    """x: [B, N, C]; weights pre-laid-out by prepare_attention_params."""
    B, N, C = x.shape
    H = num_heads
    hd = C // H

    TQ = _pick_tile(N, q_tile)
    TK = _pick_tile(N, kv_tile)
    nq = N // TQ
    nk = N // TK

    # --- 1) QKV projection -------------------------------------------------
    qkv_shape = jax.ShapeDtypeStruct((B, H, N, hd), x.dtype)
    q, k, v = pl.pallas_call(
        functools.partial(_qkv_proj_kernel, head_dim=hd),
        out_shape=(qkv_shape, qkv_shape, qkv_shape),
        grid=(B, nq, H),
        in_specs=[
            pl.BlockSpec((1, TQ, C), lambda b, qi, h: (b, qi, 0)),
            pl.BlockSpec((1, C, 3 * hd), lambda b, qi, h: (h, 0, 0)),
        ],
        out_specs=(
            pl.BlockSpec((1, 1, TQ, hd), lambda b, qi, h: (b, h, qi, 0)),
            pl.BlockSpec((1, 1, TQ, hd), lambda b, qi, h: (b, h, qi, 0)),
            pl.BlockSpec((1, 1, TQ, hd), lambda b, qi, h: (b, h, qi, 0)),
        ),
        compiler_params=pltpu.CompilerParams(
            dimension_semantics=("parallel", "parallel", "parallel")),
    )(x, w_qkv)

    # --- 2) Fused flash attention + output projection ----------------------
    # NOTE: q/k/v intermediates keep an (..., hd)-lane layout (hd may be <128);
    # folding 128/hd heads per block for fully lane-dense loads is a further
    # optimization not applied here. The HBM output is lane-dense over C.
    out = pl.pallas_call(
        _flash_attn_proj_kernel,
        out_shape=jax.ShapeDtypeStruct((B, N, C), x.dtype),
        grid=(B, nq, H, nk),
        in_specs=[
            pl.BlockSpec((1, 1, TQ, hd), lambda b, qi, h, ki: (b, h, qi, 0)),
            pl.BlockSpec((1, 1, TK, hd), lambda b, qi, h, ki: (b, h, ki, 0)),
            pl.BlockSpec((1, 1, TK, hd), lambda b, qi, h, ki: (b, h, ki, 0)),
            pl.BlockSpec((H, hd, C), lambda b, qi, h, ki: (0, 0, 0)),   # resident
            pl.BlockSpec((1, C), lambda b, qi, h, ki: (0, 0)),          # resident
        ],
        out_specs=pl.BlockSpec((1, TQ, C), lambda b, qi, h, ki: (b, qi, 0)),
        scratch_shapes=[
            pltpu.VMEM((TQ, 1), jnp.float32),    # running max m
            pltpu.VMEM((TQ, 1), jnp.float32),    # running denom l
            pltpu.VMEM((TQ, hd), jnp.float32),   # per-head context accumulator
            pltpu.VMEM((TQ, C), jnp.float32),    # output-projection accumulator
        ],
        compiler_params=pltpu.CompilerParams(
            dimension_semantics=("parallel", "parallel", "arbitrary",
                                 "arbitrary")),
    )(q, k, v, w_proj, bias)

    return out


def attention_reference(x, wqkv_t, wproj_t, bproj, *, num_heads):
    """Plain-JAX reference mirroring the PyTorch forward (eval mode)."""
    B, N, C = x.shape
    head_dim = C // num_heads
    scale = head_dim ** (-0.5)

    qkv = x @ wqkv_t                                            # (B, N, 3C)
    qkv = qkv.reshape(B, N, 3, num_heads, head_dim)
    qkv = jnp.transpose(qkv, (2, 0, 3, 1, 4))                   # (3, B, H, N, hd)
    q, k, v = qkv[0], qkv[1], qkv[2]

    attn = jnp.einsum('bhnd,bhmd->bhnm', q, k) * scale
    attn = jax.nn.softmax(attn, axis=-1)
    out = jnp.einsum('bhnm,bhmd->bhnd', attn, v)
    out = jnp.transpose(out, (0, 2, 1, 3)).reshape(B, N, C)
    return out @ wproj_t + bproj[0]


if __name__ == "__main__":
    # Small shapes consistent with the module: B=2 sequences of N=8 tokens,
    # embed dim C=32, num_heads=8 -> head_dim=4.
    B, N, C = 2, 8, 32
    num_heads = 8

    key = jax.random.PRNGKey(0)
    kx, kqkv, kproj, kbias = jax.random.split(key, 4)

    x = jax.random.normal(kx, (B, N, C), dtype=jnp.float32)
    # Linear weights stored pre-transposed [in_features, out_features].
    wqkv_t = jax.random.normal(kqkv, (C, 3 * C), dtype=jnp.float32) * 0.05
    wproj_t = jax.random.normal(kproj, (C, C), dtype=jnp.float32) * 0.05
    bproj = jax.random.normal(kbias, (1, C), dtype=jnp.float32) * 0.05

    # TODO(synk): SOT (Sinkhorn optimal-transport) attention branch, plotting,
    # and dropout RNG are not exercised in the default config (withSOT=False,
    # plot=False, eval mode), so they are intentionally not implemented.

    # One-time weight re-layout, hoisted out of the attention call.
    w_qkv, w_proj, bias = prepare_attention_params(
        wqkv_t, wproj_t, bproj, num_heads=num_heads)

    attn_fn = jax.jit(functools.partial(attention_pallas, num_heads=num_heads))
    out = jax.block_until_ready(attn_fn(x, w_qkv, w_proj, bias))

    ref = attention_reference(x, wqkv_t, wproj_t, bproj, num_heads=num_heads)
    assert out.shape == (B, N, C)
    # Tolerance accounts for the approximate (EUP) reciprocal in the softmax
    # denominator and MXU f32 matmul passes vs. the plain-JAX reference.
    assert jnp.allclose(out, ref, atol=2e-3, rtol=2e-3), "mismatch vs reference"

    print("KERNEL_OK")
</pallas_src>

<mosaic_0001>
module attributes {stable_mosaic.version = 11 : i64} {
  func.func @_qkv_proj_kernel(%arg0: i32, %arg1: i32, %arg2: i32, %arg3: memref<1x8x32xf32, #tpu.memory_space<vmem>>, %arg4: memref<1x32x12xf32, #tpu.memory_space<vmem>>, %arg5: memref<1x1x8x4xf32, #tpu.memory_space<vmem>>, %arg6: memref<1x1x8x4xf32, #tpu.memory_space<vmem>>, %arg7: memref<1x1x8x4xf32, #tpu.memory_space<vmem>>) attributes {dimension_semantics = [#tpu.dimension_semantics<parallel>, #tpu.dimension_semantics<parallel>, #tpu.dimension_semantics<parallel>], iteration_bounds = array<i64: 2, 1, 8>, scalar_prefetch = 0 : i64, scratch_operands = 0 : i64, tpu.core_type = #tpu.core_type<tc>, window_params = [{transform_indices = @transform_0, window_bounds = array<i64: 1, 8, 32>}, {transform_indices = @transform_1, window_bounds = array<i64: 1, 32, 12>}, {transform_indices = @transform_2, window_bounds = array<i64: 1, 1, 8, 4>}, {transform_indices = @transform_3, window_bounds = array<i64: 1, 1, 8, 4>}, {transform_indices = @transform_4, window_bounds = array<i64: 1, 1, 8, 4>}]} {
    %c0 = arith.constant 0 : index
    %c0_0 = arith.constant 0 : index
    %c0_1 = arith.constant 0 : index
    %0 = vector.load %arg3[%c0, %c0_0, %c0_1] : memref<1x8x32xf32, #tpu.memory_space<vmem>>, vector<1x8x32xf32>
    %1 = vector.shape_cast %0 : vector<1x8x32xf32> to vector<8x32xf32>
    %c0_2 = arith.constant 0 : index
    %c0_3 = arith.constant 0 : index
    %c0_4 = arith.constant 0 : index
    %2 = vector.load %arg4[%c0_2, %c0_3, %c0_4] : memref<1x32x12xf32, #tpu.memory_space<vmem>>, vector<1x32x12xf32>
    %3 = vector.shape_cast %2 : vector<1x32x12xf32> to vector<32x12xf32>
    %cst = arith.constant dense<0.000000e+00> : vector<8x12xf32>
    %4 = tpu.matmul %1, %3, %cst {dimension_numbers = #tpu.dot_dimension_numbers<[1], [0], [0], [1], [0, 0, 1, 1], [], []>} : vector<8x32xf32>, vector<32x12xf32>, vector<8x12xf32> -> vector<8x12xf32>
    %5 = vector.extract_strided_slice %4 {offsets = [0, 0], sizes = [8, 4], strides = [1, 1]} : vector<8x12xf32> to vector<8x4xf32>
    %c0_5 = arith.constant 0 : index
    %c0_6 = arith.constant 0 : index
    %c0_7 = arith.constant 0 : index
    %c0_8 = arith.constant 0 : index
    %6 = vector.load %arg5[%c0_5, %c0_6, %c0_7, %c0_8] : memref<1x1x8x4xf32, #tpu.memory_space<vmem>>, vector<1x1x8x4xf32>
    %7 = vector.shape_cast %6 : vector<1x1x8x4xf32> to vector<8x4xf32>
    %8 = vector.shape_cast %5 : vector<8x4xf32> to vector<1x1x8x4xf32>
    tpu.vector_store %arg5[%c0_5, %c0_6, %c0_7, %c0_8], %8 {strides = array<i32>} : memref<1x1x8x4xf32, #tpu.memory_space<vmem>>, vector<1x1x8x4xf32>,
    %9 = vector.extract_strided_slice %4 {offsets = [0, 4], sizes = [8, 4], strides = [1, 1]} : vector<8x12xf32> to vector<8x4xf32>
    %c0_9 = arith.constant 0 : index
    %c0_10 = arith.constant 0 : index
    %c0_11 = arith.constant 0 : index
    %c0_12 = arith.constant 0 : index
    %10 = vector.load %arg6[%c0_9, %c0_10, %c0_11, %c0_12] : memref<1x1x8x4xf32, #tpu.memory_space<vmem>>, vector<1x1x8x4xf32>
    %11 = vector.shape_cast %10 : vector<1x1x8x4xf32> to vector<8x4xf32>
    %12 = vector.shape_cast %9 : vector<8x4xf32> to vector<1x1x8x4xf32>
    tpu.vector_store %arg6[%c0_9, %c0_10, %c0_11, %c0_12], %12 {strides = array<i32>} : memref<1x1x8x4xf32, #tpu.memory_space<vmem>>, vector<1x1x8x4xf32>,
    %13 = vector.extract_strided_slice %4 {offsets = [0, 8], sizes = [8, 4], strides = [1, 1]} : vector<8x12xf32> to vector<8x4xf32>
    %c0_13 = arith.constant 0 : index
    %c0_14 = arith.constant 0 : index
    %c0_15 = arith.constant 0 : index
    %c0_16 = arith.constant 0 : index
    %14 = vector.load %arg7[%c0_13, %c0_14, %c0_15, %c0_16] : memref<1x1x8x4xf32, #tpu.memory_space<vmem>>, vector<1x1x8x4xf32>
    %15 = vector.shape_cast %14 : vector<1x1x8x4xf32> to vector<8x4xf32>
    %16 = vector.shape_cast %13 : vector<8x4xf32> to vector<1x1x8x4xf32>
    tpu.vector_store %arg7[%c0_13, %c0_14, %c0_15, %c0_16], %16 {strides = array<i32>} : memref<1x1x8x4xf32, #tpu.memory_space<vmem>>, vector<1x1x8x4xf32>,
    return
  }
  func.func @transform_0(%arg0: i32, %arg1: i32, %arg2: i32) -> (i32, i32, i32) {
    %c0_i32 = arith.constant 0 : i32
    %c0_i32_0 = arith.constant 0 : i32
    return %arg0, %arg1, %c0_i32 : i32, i32, i32
  }
  func.func @transform_1(%arg0: i32, %arg1: i32, %arg2: i32) -> (i32, i32, i32) {
    %c0_i32 = arith.constant 0 : i32
    %c0_i32_0 = arith.constant 0 : i32
    %c0_i32_1 = arith.constant 0 : i32
    return %arg2, %c0_i32, %c0_i32_0 : i32, i32, i32
  }
  func.func @transform_2(%arg0: i32, %arg1: i32, %arg2: i32) -> (i32, i32, i32, i32) {
    %c0_i32 = arith.constant 0 : i32
    %c0_i32_0 = arith.constant 0 : i32
    return %arg0, %arg2, %arg1, %c0_i32 : i32, i32, i32, i32
  }
  func.func @transform_3(%arg0: i32, %arg1: i32, %arg2: i32) -> (i32, i32, i32, i32) {
    %c0_i32 = arith.constant 0 : i32
    %c0_i32_0 = arith.constant 0 : i32
    return %arg0, %arg2, %arg1, %c0_i32 : i32, i32, i32, i32
  }
  func.func @transform_4(%arg0: i32, %arg1: i32, %arg2: i32) -> (i32, i32, i32, i32) {
    %c0_i32 = arith.constant 0 : i32
    %c0_i32_0 = arith.constant 0 : i32
    return %arg0, %arg2, %arg1, %c0_i32 : i32, i32, i32, i32
  }
}

module attributes {stable_mosaic.version = 11 : i64} {
  func.func @_flash_attn_proj_kernel(%arg0: i32, %arg1: i32, %arg2: i32, %arg3: i32, %arg4: memref<1x1x8x4xf32, #tpu.memory_space<vmem>>, %arg5: memref<1x1x8x4xf32, #tpu.memory_space<vmem>>, %arg6: memref<1x1x8x4xf32, #tpu.memory_space<vmem>>, %arg7: memref<8x4x32xf32, #tpu.memory_space<vmem>>, %arg8: memref<1x32xf32, #tpu.memory_space<vmem>>, %arg9: memref<1x8x32xf32, #tpu.memory_space<vmem>>, %arg10: memref<8x1xf32, #tpu.memory_space<vmem>>, %arg11: memref<8x1xf32, #tpu.memory_space<vmem>>, %arg12: memref<8x4xf32, #tpu.memory_space<vmem>>, %arg13: memref<8x32xf32, #tpu.memory_space<vmem>>) attributes {dimension_semantics = [#tpu.dimension_semantics<parallel>, #tpu.dimension_semantics<parallel>, #tpu.dimension_semantics<arbitrary>, #tpu.dimension_semantics<arbitrary>], iteration_bounds = array<i64: 2, 1, 8, 1>, scalar_prefetch = 0 : i64, scratch_operands = 4 : i64, tpu.core_type = #tpu.core_type<tc>, window_params = [{transform_indices = @transform_0, window_bounds = array<i64: 1, 1, 8, 4>}, {transform_indices = @transform_1, window_bounds = array<i64: 1, 1, 8, 4>}, {transform_indices = @transform_2, window_bounds = array<i64: 1, 1, 8, 4>}, {pipeline_mode = #tpu.pipeline_mode<synchronous>, transform_indices = @transform_3, window_bounds = array<i64: 8, 4, 32>}, {pipeline_mode = #tpu.pipeline_mode<synchronous>, transform_indices = @transform_4, window_bounds = array<i64: 1, 32>}, {transform_indices = @transform_5, window_bounds = array<i64: 1, 8, 32>}]} {
    %c0_i32 = arith.constant 0 : i32
    %0 = arith.cmpi eq, %arg2, %c0_i32 : i32
    %c0_i32_0 = arith.constant 0 : i32
    %1 = arith.cmpi eq, %arg3, %c0_i32_0 : i32
    %2 = arith.andi %0, %1 : i1
    %3 = arith.extui %2 : i1 to i32
    %c0_i32_1 = arith.constant 0 : i32
    %4 = arith.cmpi ne, %3, %c0_i32_1 : i32
    scf.if %4 {
      %cst_34 = arith.constant 0.000000e+00 : f32
      %45 = vector.broadcast %cst_34 : f32 to vector<8x32xf32>
      %c0_35 = arith.constant 0 : index
      %c0_36 = arith.constant 0 : index
      %46 = vector.load %arg13[%c0_35, %c0_36] : memref<8x32xf32, #tpu.memory_space<vmem>>, vector<8x32xf32>
      tpu.vector_store %arg13[%c0_35, %c0_36], %45 {strides = array<i32>} : memref<8x32xf32, #tpu.memory_space<vmem>>, vector<8x32xf32>,
    } else {
    }
    %c0_i32_2 = arith.constant 0 : i32
    %5 = arith.cmpi eq, %arg3, %c0_i32_2 : i32
    %6 = arith.extui %5 : i1 to i32
    %c0_i32_3 = arith.constant 0 : i32
    %7 = arith.cmpi ne, %6, %c0_i32_3 : i32
    scf.if %7 {
      %cst_34 = arith.constant 0xFF800000 : f32
      %45 = vector.broadcast %cst_34 : f32 to vector<8x1xf32>
      %c0_35 = arith.constant 0 : index
      %c0_36 = arith.constant 0 : index
      %46 = vector.load %arg10[%c0_35, %c0_36] : memref<8x1xf32, #tpu.memory_space<vmem>>, vector<8x1xf32>
      tpu.vector_store %arg10[%c0_35, %c0_36], %45 {strides = array<i32>} : memref<8x1xf32, #tpu.memory_space<vmem>>, vector<8x1xf32>,
      %cst_37 = arith.constant 0.000000e+00 : f32
      %47 = vector.broadcast %cst_37 : f32 to vector<8x1xf32>
      %c0_38 = arith.constant 0 : index
      %c0_39 = arith.constant 0 : index
      %48 = vector.load %arg11[%c0_38, %c0_39] : memref<8x1xf32, #tpu.memory_space<vmem>>, vector<8x1xf32>
      tpu.vector_store %arg11[%c0_38, %c0_39], %47 {strides = array<i32>} : memref<8x1xf32, #tpu.memory_space<vmem>>, vector<8x1xf32>,
      %cst_40 = arith.constant 0.000000e+00 : f32
      %49 = vector.broadcast %cst_40 : f32 to vector<8x4xf32>
      %c0_41 = arith.constant 0 : index
      %c0_42 = arith.constant 0 : index
      %50 = vector.load %arg12[%c0_41, %c0_42] : memref<8x4xf32, #tpu.memory_space<vmem>>, vector<8x4xf32>
      tpu.vector_store %arg12[%c0_41, %c0_42], %49 {strides = array<i32>} : memref<8x4xf32, #tpu.memory_space<vmem>>, vector<8x4xf32>,
    } else {
    }
    %c0 = arith.constant 0 : index
    %c0_4 = arith.constant 0 : index
    %c0_5 = arith.constant 0 : index
    %c0_6 = arith.constant 0 : index
    %8 = vector.load %arg4[%c0, %c0_4, %c0_5, %c0_6] : memref<1x1x8x4xf32, #tpu.memory_space<vmem>>, vector<1x1x8x4xf32>
    %9 = vector.shape_cast %8 : vector<1x1x8x4xf32> to vector<8x4xf32>
    %c0_7 = arith.constant 0 : index
    %c0_8 = arith.constant 0 : index
    %c0_9 = arith.constant 0 : index
    %c0_10 = arith.constant 0 : index
    %10 = vector.load %arg5[%c0_7, %c0_8, %c0_9, %c0_10] : memref<1x1x8x4xf32, #tpu.memory_space<vmem>>, vector<1x1x8x4xf32>
    %11 = vector.shape_cast %10 : vector<1x1x8x4xf32> to vector<8x4xf32>
    %c0_11 = arith.constant 0 : index
    %c0_12 = arith.constant 0 : index
    %c0_13 = arith.constant 0 : index
    %c0_14 = arith.constant 0 : index
    %12 = vector.load %arg6[%c0_11, %c0_12, %c0_13, %c0_14] : memref<1x1x8x4xf32, #tpu.memory_space<vmem>>, vector<1x1x8x4xf32>
    %13 = vector.shape_cast %12 : vector<1x1x8x4xf32> to vector<8x4xf32>
    %cst = arith.constant dense<0.000000e+00> : vector<8x8xf32>
    %14 = tpu.matmul %9, %11, %cst {dimension_numbers = #tpu.dot_dimension_numbers<[1], [1], [0], [0], [0, 0, 1, 0], [], []>} : vector<8x4xf32>, vector<8x4xf32>, vector<8x8xf32> -> vector<8x8xf32>
    %c0_15 = arith.constant 0 : index
    %c0_16 = arith.constant 0 : index
    %15 = vector.load %arg10[%c0_15, %c0_16] : memref<8x1xf32, #tpu.memory_space<vmem>>, vector<8x1xf32>
    %cst_17 = arith.constant dense<0xFF800000> : vector<8xf32>
    %16 = vector.multi_reduction <maximumf>, %14, %cst_17 [1] : vector<8x8xf32> to vector<8xf32>
    %17 = vector.shape_cast %16 : vector<8xf32> to vector<8x1xf32>
    %18 = arith.maximumf %15, %17 : vector<8x1xf32>
    %19 = arith.subf %15, %18 : vector<8x1xf32>
    %20 = math.exp %19 : vector<8x1xf32>
    %21 = vector.broadcast %18 : vector<8x1xf32> to vector<8x8xf32>
    %22 = arith.subf %14, %21 : vector<8x8xf32>
    %23 = math.exp %22 : vector<8x8xf32>
    %c0_18 = arith.constant 0 : index
    %c0_19 = arith.constant 0 : index
    %24 = vector.load %arg11[%c0_18, %c0_19] : memref<8x1xf32, #tpu.memory_space<vmem>>, vector<8x1xf32>
    %25 = arith.mulf %20, %24 : vector<8x1xf32>
    %cst_20 = arith.constant dense<0.000000e+00> : vector<8xf32>
    %26 = vector.multi_reduction <add>, %23, %cst_20 [1] : vector<8x8xf32> to vector<8xf32>
    %27 = vector.shape_cast %26 : vector<8xf32> to vector<8x1xf32>
    %28 = arith.addf %25, %27 : vector<8x1xf32>
    %c0_21 = arith.constant 0 : index
    %c0_22 = arith.constant 0 : index
    %29 = vector.load %arg11[%c0_21, %c0_22] : memref<8x1xf32, #tpu.memory_space<vmem>>, vector<8x1xf32>
    tpu.vector_store %arg11[%c0_21, %c0_22], %28 {strides = array<i32>} : memref<8x1xf32, #tpu.memory_space<vmem>>, vector<8x1xf32>,
    %c0_23 = arith.constant 0 : index
    %c0_24 = arith.constant 0 : index
    %30 = vector.load %arg12[%c0_23, %c0_24] : memref<8x4xf32, #tpu.memory_space<vmem>>, vector<8x4xf32>
    %31 = vector.broadcast %20 : vector<8x1xf32> to vector<8x4xf32>
    %32 = arith.mulf %31, %30 : vector<8x4xf32>
    %cst_25 = arith.constant dense<0.000000e+00> : vector<8x4xf32>
    %33 = tpu.matmul %23, %13, %cst_25 {dimension_numbers = #tpu.dot_dimension_numbers<[1], [0], [0], [1], [0, 0, 1, 1], [], []>} : vector<8x8xf32>, vector<8x4xf32>, vector<8x4xf32> -> vector<8x4xf32>
    %34 = arith.addf %32, %33 : vector<8x4xf32>
    %c0_26 = arith.constant 0 : index
    %c0_27 = arith.constant 0 : index
    %35 = vector.load %arg12[%c0_26, %c0_27] : memref<8x4xf32, #tpu.memory_space<vmem>>, vector<8x4xf32>
    tpu.vector_store %arg12[%c0_26, %c0_27], %34 {strides = array<i32>} : memref<8x4xf32, #tpu.memory_space<vmem>>, vector<8x4xf32>,
    %c0_28 = arith.constant 0 : index
    %c0_29 = arith.constant 0 : index
    %36 = vector.load %arg10[%c0_28, %c0_29] : memref<8x1xf32, #tpu.memory_space<vmem>>, vector<8x1xf32>
    tpu.vector_store %arg10[%c0_28, %c0_29], %18 {strides = array<i32>} : memref<8x1xf32, #tpu.memory_space<vmem>>, vector<8x1xf32>,
    %c0_i32_30 = arith.constant 0 : i32
    %37 = arith.cmpi eq, %arg3, %c0_i32_30 : i32
    %38 = arith.extui %37 : i1 to i32
    %c0_i32_31 = arith.constant 0 : i32
    %39 = arith.cmpi ne, %38, %c0_i32_31 : i32
    scf.if %39 {
      %c0_34 = arith.constant 0 : index
      %c0_35 = arith.constant 0 : index
      %45 = vector.load %arg11[%c0_34, %c0_35] : memref<8x1xf32, #tpu.memory_space<vmem>>, vector<8x1xf32>
      %46 = tpu.reciprocal %45 {approx = true} : vector<8x1xf32> -> vector<8x1xf32>
      %c0_36 = arith.constant 0 : index
      %c0_37 = arith.constant 0 : index
      %47 = vector.load %arg12[%c0_36, %c0_37] : memref<8x4xf32, #tpu.memory_space<vmem>>, vector<8x4xf32>
      %48 = vector.broadcast %46 : vector<8x1xf32> to vector<8x4xf32>
      %49 = arith.mulf %47, %48 : vector<8x4xf32>
      %c0_38 = arith.constant 0 : index
      %c0_39 = arith.constant 0 : index
      %50 = vector.load %arg13[%c0_38, %c0_39] : memref<8x32xf32, #tpu.memory_space<vmem>>, vector<8x32xf32>
      %51 = arith.index_cast %arg2 : i32 to index
      %c0_40 = arith.constant 0 : index
      %c0_41 = arith.constant 0 : index
      %52 = vector.load %arg7[%51, %c0_40, %c0_41] : memref<8x4x32xf32, #tpu.memory_space<vmem>>, vector<1x4x32xf32>
      %53 = vector.shape_cast %52 : vector<1x4x32xf32> to vector<4x32xf32>
      %cst_42 = arith.constant dense<0.000000e+00> : vector<8x32xf32>
      %54 = tpu.matmul %49, %53, %cst_42 {dimension_numbers = #tpu.dot_dimension_numbers<[1], [0], [0], [1], [0, 0, 1, 1], [], []>} : vector<8x4xf32>, vector<4x32xf32>, vector<8x32xf32> -> vector<8x32xf32>
      %55 = arith.addf %50, %54 : vector<8x32xf32>
      %c0_43 = arith.constant 0 : index
      %c0_44 = arith.constant 0 : index
      %56 = vector.load %arg13[%c0_43, %c0_44] : memref<8x32xf32, #tpu.memory_space<vmem>>, vector<8x32xf32>
      tpu.vector_store %arg13[%c0_43, %c0_44], %55 {strides = array<i32>} : memref<8x32xf32, #tpu.memory_space<vmem>>, vector<8x32xf32>,
    } else {
    }
    %c7_i32 = arith.constant 7 : i32
    %40 = arith.cmpi eq, %arg2, %c7_i32 : i32
    %c0_i32_32 = arith.constant 0 : i32
    %41 = arith.cmpi eq, %arg3, %c0_i32_32 : i32
    %42 = arith.andi %40, %41 : i1
    %43 = arith.extui %42 : i1 to i32
    %c0_i32_33 = arith.constant 0 : i32
    %44 = arith.cmpi ne, %43, %c0_i32_33 : i32
    scf.if %44 {
      %c0_34 = arith.constant 0 : index
      %c0_35 = arith.constant 0 : index
      %45 = vector.load %arg13[%c0_34, %c0_35] : memref<8x32xf32, #tpu.memory_space<vmem>>, vector<8x32xf32>
      %c0_36 = arith.constant 0 : index
      %c0_37 = arith.constant 0 : index
      %46 = vector.load %arg8[%c0_36, %c0_37] : memref<1x32xf32, #tpu.memory_space<vmem>>, vector<1x32xf32>
      %47 = vector.broadcast %46 : vector<1x32xf32> to vector<8x32xf32>
      %48 = arith.addf %45, %47 : vector<8x32xf32>
      %c0_38 = arith.constant 0 : index
      %c0_39 = arith.constant 0 : index
      %c0_40 = arith.constant 0 : index
      %49 = vector.load %arg9[%c0_38, %c0_39, %c0_40] : memref<1x8x32xf32, #tpu.memory_space<vmem>>, vector<1x8x32xf32>
      %50 = vector.shape_cast %49 : vector<1x8x32xf32> to vector<8x32xf32>
      %51 = vector.shape_cast %48 : vector<8x32xf32> to vector<1x8x32xf32>
      tpu.vector_store %arg9[%c0_38, %c0_39, %c0_40], %51 {strides = array<i32>} : memref<1x8x32xf32, #tpu.memory_space<vmem>>, vector<1x8x32xf32>,
    } else {
    }
    return
  }
  func.func @transform_0(%arg0: i32, %arg1: i32, %arg2: i32, %arg3: i32) -> (i32, i32, i32, i32) {
    %c0_i32 = arith.constant 0 : i32
    %c0_i32_0 = arith.constant 0 : i32
    return %arg0, %arg2, %arg1, %c0_i32 : i32, i32, i32, i32
  }
  func.func @transform_1(%arg0: i32, %arg1: i32, %arg2: i32, %arg3: i32) -> (i32, i32, i32, i32) {
    %c0_i32 = arith.constant 0 : i32
    %c0_i32_0 = arith.constant 0 : i32
    return %arg0, %arg2, %arg3, %c0_i32 : i32, i32, i32, i32
  }
  func.func @transform_2(%arg0: i32, %arg1: i32, %arg2: i32, %arg3: i32) -> (i32, i32, i32, i32) {
    %c0_i32 = arith.constant 0 : i32
    %c0_i32_0 = arith.constant 0 : i32
    return %arg0, %arg2, %arg3, %c0_i32 : i32, i32, i32, i32
  }
  func.func @transform_3(%arg0: i32, %arg1: i32, %arg2: i32, %arg3: i32) -> (i32, i32, i32) {
    %c0_i32 = arith.constant 0 : i32
    %c0_i32_0 = arith.constant 0 : i32
    %c0_i32_1 = arith.constant 0 : i32
    %c0_i32_2 = arith.constant 0 : i32
    return %c0_i32, %c0_i32_0, %c0_i32_1 : i32, i32, i32
  }
  func.func @transform_4(%arg0: i32, %arg1: i32, %arg2: i32, %arg3: i32) -> (i32, i32) {
    %c0_i32 = arith.constant 0 : i32
    %c0_i32_0 = arith.constant 0 : i32
    %c0_i32_1 = arith.constant 0 : i32
    return %c0_i32, %c0_i32_0 : i32, i32
  }
  func.func @transform_5(%arg0: i32, %arg1: i32, %arg2: i32, %arg3: i32) -> (i32, i32, i32) {
    %c0_i32 = arith.constant 0 : i32
    %c0_i32_0 = arith.constant 0 : i32
    return %arg0, %arg1, %c0_i32 : i32, i32, i32
  }
}

</mosaic_0001>

<llo_original>
// kernel: attention_pallas.2
$region0: #{attention_pallas.2}
  #allocation0 [shape = 'u32[]', space=smem, size = 0x4, offset = 0x4, fixed_abs, tag = 'smem constant byte address 0x4 - core index']
  #allocation1 [shape = 'u32[144,128]{1,0:T(1,128)}', space=vmem, size = 0x12000, scoped, tag = 'internal scratch']
  %s0 = inlined_call_operand.vmem [shape: f32[2,8,32], index: 0, kind: input, shape index: {}]
  %s1 = inlined_call_operand.vmem [shape: f32[8,32,12], index: 1, kind: input, shape index: {}]
  %s2 = inlined_call_operand.vmem [shape: f32[2,8,8,4], index: 2, kind: output, shape index: {0}]
  %s3 = inlined_call_operand.vmem [shape: f32[2,8,8,4], index: 3, kind: output, shape index: {1}]
  %s4 = inlined_call_operand.vmem [shape: f32[2,8,8,4], index: 4, kind: output, shape index: {2}]
  %5 = xla_tuple %s2, %s3, %s4
  %s6 = sld [smem:[#allocation0]]
  $region57: #{attention_pallas.2} parent=0
    _
  %s8 = ssub.s32 1, %s6
  %s9 = scalar_select 0, %s8, %s6
  loop: start=0, step=1, limit=18
  $region2: #{attention_pallas.2} parent=0 // loop_pre_header
    _
  $region3: #{attention_pallas.2} parent=0 // loop_header
    %s11 = sphi 0, %s15
    %p12 = scmp.ge.s32.totalorder %s11, 18
    %s18 = sphi 0, %s37
    %s19 = sphi 0, %s33
    %s20 = sphi 0, %s29
    %s21 = sphi 0, %s18
    %s22 = sphi 0, %s19
    %s23 = sphi 0, %s20
    %s24 = sphi 0, %s21
    %s25 = sphi 0, %s22
    %s26 = sphi 0, %s23
    %s42 = sphi 0, %s44
    %s45 = sphi 0, %s42
    %s46 = sphi 0, %s45
    %s62 = sphi 0, %s46
    %s68 = sphi 0, %s70
    %s71 = sphi 0, %s68
    %s72 = sphi 0, %s71
    %s88 = sphi 0, %s72
    %s98 = sphi 0, %s100
    %s101 = sphi 0, %s98
    %s102 = sphi 0, %s101
    %s118 = sphi 0, %s102
    %s128 = sphi 0, %s130
    %s131 = sphi 0, %s128
    %s132 = sphi 0, %s131
    %s148 = sphi 0, %s132
    %s158 = sphi 0, %s160
    %s161 = sphi 0, %s158
    %s162 = sphi 0, %s161
    %s178 = sphi 0, %s162
  $region4: #{attention_pallas.2} parent=0 // loop_header_branch
    %14 = sbr.rel (%p12) target = $region8
  $region5: #{attention_pallas.2} parent=0 // loop_body
    %s16 = ssub.s32 %s11, 1
    %s17 = ssub.s32 %s11, 2
    %s27 = sadd.s32 1, %s20
    %p28 = scmp.ge.s32.totalorder %s27, 8
    %s29 = scalar_select %p28, 0, %s27
    %s30 = sadd.s32 1, %s19
    %s31 = scalar_select %p28, %s30, %s19
    %p32 = scmp.ge.s32.totalorder %s31, 1
    %s33 = scalar_select %p32, 0, %s31
    %s34 = sadd.s32 1, %s18
    %s35 = scalar_select %p32, %s34, %s18
    %p36 = scmp.ge.s32.totalorder %s35, 2
    %s37 = scalar_select %p36, 0, %s35
    %s38 = ssub.s32 %s18, %s37
    %s39 = ssub.s32 %s19, %s33
    %s40 = sor.u32 %s38, %s39
    %p41 = scmp.eq.s32.totalorder %s40, 0
    %s43 = sadd.s32 %s42, 1
    %s44 = scalar_select %p41, %s42, %s43
    %p47 = pneg %p41
    %p48 = scmp.eq.s32.totalorder %s11, 15
    %p49 = por %p47, %p48
    %p50 = scmp.ne.s32.totalorder %s42, %s45
    %p51 = scmp.eq.s32.totalorder %s11, 0
    %p52 = por %p50, %p51
    %p53 = scmp.ne.s32.totalorder %s42, %s45
    %p54 = scmp.eq.s32.totalorder %s16, 15
    %p55 = por %p53, %p54
    %p56 = scmp.ne.s32.totalorder %s45, %s46
    %p57 = scmp.eq.s32.totalorder %s16, 0
    %p58 = por %p56, %p57
    %p59 = scmp.ne.s32.totalorder %s45, %s46
    %p60 = scmp.eq.s32.totalorder %s17, 15
    %p61 = por %p59, %p60
    %p63 = scmp.ne.s32.totalorder %s46, %s62
    %p64 = scmp.eq.s32.totalorder %s17, 0
    %p65 = por %p63, %p64
    %s66 = ssub.s32 %s20, %s29
    %p67 = scmp.eq.s32.totalorder %s66, 0
    %s69 = sadd.s32 %s68, 1
    %s70 = scalar_select %p67, %s68, %s69
    %p73 = pneg %p67
    %p74 = scmp.eq.s32.totalorder %s11, 15
    %p75 = por %p73, %p74
    %p76 = scmp.ne.s32.totalorder %s68, %s71
    %p77 = scmp.eq.s32.totalorder %s11, 0
    %p78 = por %p76, %p77
    %p79 = scmp.ne.s32.totalorder %s68, %s71
    %p80 = scmp.eq.s32.totalorder %s16, 15
    %p81 = por %p79, %p80
    %p82 = scmp.ne.s32.totalorder %s71, %s72
    %p83 = scmp.eq.s32.totalorder %s16, 0
    %p84 = por %p82, %p83
    %p85 = scmp.ne.s32.totalorder %s71, %s72
    %p86 = scmp.eq.s32.totalorder %s17, 15
    %p87 = por %p85, %p86
    %p89 = scmp.ne.s32.totalorder %s72, %s88
    %p90 = scmp.eq.s32.totalorder %s17, 0
    %p91 = por %p89, %p90
    %s92 = ssub.s32 %s18, %s37
    %s93 = ssub.s32 %s20, %s29
    %s94 = sor.u32 %s92, %s93
    %s95 = ssub.s32 %s19, %s33
    %s96 = sor.u32 %s94, %s95
    %p97 = scmp.eq.s32.totalorder %s96, 0
    %s99 = sadd.s32 %s98, 1
    %s100 = scalar_select %p97, %s98, %s99
    %p103 = pneg %p97
    %p104 = scmp.eq.s32.totalorder %s11, 15
    %p105 = por %p103, %p104
    %p106 = scmp.ne.s32.totalorder %s98, %s101
    %p107 = scmp.eq.s32.totalorder %s11, 0
    %p108 = por %p106, %p107
    %p109 = scmp.ne.s32.totalorder %s98, %s101
    %p110 = scmp.eq.s32.totalorder %s16, 15
    %p111 = por %p109, %p110
    %p112 = scmp.ne.s32.totalorder %s101, %s102
    %p113 = scmp.eq.s32.totalorder %s16, 0
    %p114 = por %p112, %p113
    %p115 = scmp.ne.s32.totalorder %s101, %s102
    %p116 = scmp.eq.s32.totalorder %s17, 15
    %p117 = por %p115, %p116
    %p119 = scmp.ne.s32.totalorder %s102, %s118
    %p120 = scmp.eq.s32.totalorder %s17, 0
    %p121 = por %p119, %p120
    %s122 = ssub.s32 %s18, %s37
    %s123 = ssub.s32 %s20, %s29
    %s124 = sor.u32 %s122, %s123
    %s125 = ssub.s32 %s19, %s33
    %s126 = sor.u32 %s124, %s125
    %p127 = scmp.eq.s32.totalorder %s126, 0
    %s129 = sadd.s32 %s128, 1
    %s130 = scalar_select %p127, %s128, %s129
    %p133 = pneg %p127
    %p134 = scmp.eq.s32.totalorder %s11, 15
    %p135 = por %p133, %p134
    %p136 = scmp.ne.s32.totalorder %s128, %s131
    %p137 = scmp.eq.s32.totalorder %s11, 0
    %p138 = por %p136, %p137
    %p139 = scmp.ne.s32.totalorder %s128, %s131
    %p140 = scmp.eq.s32.totalorder %s16, 15
    %p141 = por %p139, %p140
    %p142 = scmp.ne.s32.totalorder %s131, %s132
    %p143 = scmp.eq.s32.totalorder %s16, 0
    %p144 = por %p142, %p143
    %p145 = scmp.ne.s32.totalorder %s131, %s132
    %p146 = scmp.eq.s32.totalorder %s17, 15
    %p147 = por %p145, %p146
    %p149 = scmp.ne.s32.totalorder %s132, %s148
    %p150 = scmp.eq.s32.totalorder %s17, 0
    %p151 = por %p149, %p150
    %s152 = ssub.s32 %s18, %s37
    %s153 = ssub.s32 %s20, %s29
    %s154 = sor.u32 %s152, %s153
    %s155 = ssub.s32 %s19, %s33
    %s156 = sor.u32 %s154, %s155
    %p157 = scmp.eq.s32.totalorder %s156, 0
    %s159 = sadd.s32 %s158, 1
    %s160 = scalar_select %p157, %s158, %s159
    %p163 = pneg %p157
    %p164 = scmp.eq.s32.totalorder %s11, 15
    %p165 = por %p163, %p164
    %p166 = scmp.ne.s32.totalorder %s158, %s161
    %p167 = scmp.eq.s32.totalorder %s11, 0
    %p168 = por %p166, %p167
    %p169 = scmp.ne.s32.totalorder %s158, %s161
    %p170 = scmp.eq.s32.totalorder %s16, 15
    %p171 = por %p169, %p170
    %p172 = scmp.ne.s32.totalorder %s161, %s162
    %p173 = scmp.eq.s32.totalorder %s16, 0
    %p174 = por %p172, %p173
    %p175 = scmp.ne.s32.totalorder %s161, %s162
    %p176 = scmp.eq.s32.totalorder %s17, 15
    %p177 = por %p175, %p176
    %p179 = scmp.ne.s32.totalorder %s162, %s178
    %p180 = scmp.eq.s32.totalorder %s17, 0
    %p181 = por %p179, %p180
    %p182 = scmp.le.s32.totalorder 1, %s11
    %p183 = scmp.lt.s32.totalorder %s11, 17
    %p184 = pnand %p182, %p183
    %p185 = pneg %p184
    // Predicated region
    $region9: #{attention_pallas.2} parent=5 // pred_check
      _
    $region10: #{attention_pallas.2} parent=5 // pred_check_branch
      %187 = sbr.rel (%p184) target = $region12
    $region11: #{attention_pallas.2} parent=5 // pred_region
      %s188 = ssub.s32 %s11, 1
    $region12: #{attention_pallas.2} parent=5 // pred_fallthru
      _
    %p189 = scmp.lt.s32.totalorder %s11, 16
    // Predicated region
    $region13: #{attention_pallas.2} parent=5 // pred_check
      %p190 = pneg %p189
    $region14: #{attention_pallas.2} parent=5 // pred_check_branch
      %192 = sbr.rel (%p190) target = $region16
    $region15: #{attention_pallas.2} parent=5 // pred_region
      // Predicated region
      $region17: #{attention_pallas.2} parent=15 // pred_check
        %p193 = pneg %p52
      $region18: #{attention_pallas.2} parent=15 // pred_check_branch
        %195 = sbr.rel (%p193) target = $region20
      $region19: #{attention_pallas.2} parent=15 // pred_region
        %p196 = scmp.lt.s32.totalorder %s18, 1
        %s197 = scalar_select %p196, %s18, 1
        %p198 = scmp.lt.s32.totalorder %s19, 0
        %s199 = scalar_select %p198, %s19, 0
        %s200 = sadd.s32 %s199, %s197
        %s201 = smul.addr %s200, 8
        %s202 = scalar_lea.vmem %s0, %s201
      $region20: #{attention_pallas.2} parent=15 // pred_fallthru
        _
      // Predicated region
      $region21: #{attention_pallas.2} parent=15 // pred_check
        %p203 = pneg %p78
      $region22: #{attention_pallas.2} parent=15 // pred_check_branch
        %205 = sbr.rel (%p203) target = $region24
      $region23: #{attention_pallas.2} parent=15 // pred_region
        %p206 = scmp.lt.s32.totalorder %s20, 7
        %s207 = scalar_select %p206, %s20, 7
        %s208 = smul.addr %s207, 4
        %s209 = smul.addr %s208, 8
        %s210 = scalar_lea.vmem %s1, %s209
      $region24: #{attention_pallas.2} parent=15 // pred_fallthru
        _
    $region16: #{attention_pallas.2} parent=5 // pred_fallthru
      _
    %p211 = scmp.le.s32.totalorder 1, %s11
    %p212 = scmp.lt.s32.totalorder %s11, 17
    %p213 = pnand %p211, %p212
    %p214 = pneg %p213
    // Predicated region
    $region25: #{attention_pallas.2} parent=5 // pred_check
      _
    $region26: #{attention_pallas.2} parent=5 // pred_check_branch
      %216 = sbr.rel (%p213) target = $region28
    $region27: #{attention_pallas.2} parent=5 // pred_region
      %s217 = ssub.s32 %s11, 1
      %p218 = scmp.lt.s32.totalorder %s21, 1
      %s219 = scalar_select %p218, %s21, 1
      %p220 = scmp.lt.s32.totalorder %s22, 0
      %s221 = scalar_select %p220, %s22, 0
      %s222 = sadd.s32 %s221, %s219
      %s223 = smul.addr %s222, 8
      %s224 = scalar_lea.vmem %s0, %s223
      %p225 = pneg %p58
      %p226 = pneg %p55
      %p227 = scmp.lt.s32.totalorder %s23, 7
      %s228 = scalar_select %p227, %s23, 7
      %s229 = smul.addr %s228, 4
      %s230 = smul.addr %s229, 8
      %s231 = scalar_lea.vmem %s1, %s230
      %p232 = pneg %p84
      %p233 = pneg %p81
      %p234 = pneg %p114
      %p235 = pneg %p111
      %p236 = scmp.lt.s32.totalorder %s21, 1
      %s237 = scalar_select %p236, %s21, 1
      %p238 = scmp.lt.s32.totalorder %s23, 7
      %s239 = scalar_select %p238, %s23, 7
      %p240 = scmp.lt.s32.totalorder %s22, 0
      %s241 = scalar_select %p240, %s22, 0
      %s242 = sadd.s32 %s241, %s239
      %s243 = smul.addr %s237, 8
      %s244 = sadd.s32 %s242, %s243
      %s245 = smul.addr %s244, 8
      %s246 = scalar_lea.vmem %s2, %s245
      %p247 = pneg %p144
      %p248 = pneg %p141
      %p249 = scmp.lt.s32.totalorder %s21, 1
      %s250 = scalar_select %p249, %s21, 1
      %p251 = scmp.lt.s32.totalorder %s23, 7
      %s252 = scalar_select %p251, %s23, 7
      %p253 = scmp.lt.s32.totalorder %s22, 0
      %s254 = scalar_select %p253, %s22, 0
      %s255 = sadd.s32 %s254, %s252
      %s256 = smul.addr %s250, 8
      %s257 = sadd.s32 %s255, %s256
      %s258 = smul.addr %s257, 8
      %s259 = scalar_lea.vmem %s3, %s258
      %p260 = pneg %p174
      %p261 = pneg %p171
      %p262 = scmp.lt.s32.totalorder %s21, 1
      %s263 = scalar_select %p262, %s21, 1
      %p264 = scmp.lt.s32.totalorder %s23, 7
      %s265 = scalar_select %p264, %s23, 7
      %p266 = scmp.lt.s32.totalorder %s22, 0
      %s267 = scalar_select %p266, %s22, 0
      %s268 = sadd.s32 %s267, %s265
      %s269 = smul.addr %s263, 8
      %s270 = sadd.s32 %s268, %s269
      %s271 = smul.addr %s270, 8
      %s272 = scalar_lea.vmem %s4, %s271
      %p273 = scmp.lt.s32.totalorder %s21, 1
      %s274 = scalar_select %p273, %s21, 1
      %p275 = scmp.lt.s32.totalorder %s22, 0
      %s276 = scalar_select %p275, %s22, 0
      %s277 = sadd.s32 %s276, %s274
      %s278 = smul.addr %s277, 8
      %s279 = scalar_lea.vmem %s0, %s278
      %p280 = scmp.lt.s32.totalorder %s23, 7
      %s281 = scalar_select %p280, %s23, 7
      %s282 = smul.addr %s281, 4
      %s283 = smul.addr %s282, 8
      %s284 = scalar_lea.vmem %s1, %s283
      %p285 = scmp.lt.s32.totalorder %s21, 1
      %s286 = scalar_select %p285, %s21, 1
      %p287 = scmp.lt.s32.totalorder %s23, 7
      %s288 = scalar_select %p287, %s23, 7
      %p289 = scmp.lt.s32.totalorder %s22, 0
      %s290 = scalar_select %p289, %s22, 0
      %s291 = sadd.s32 %s290, %s288
      %s292 = smul.addr %s286, 8
      %s293 = sadd.s32 %s291, %s292
      %s294 = smul.addr %s293, 8
      %s295 = scalar_lea.vmem %s2, %s294
      %p296 = scmp.lt.s32.totalorder %s21, 1
      %s297 = scalar_select %p296, %s21, 1
      %p298 = scmp.lt.s32.totalorder %s23, 7
      %s299 = scalar_select %p298, %s23, 7
      %p300 = scmp.lt.s32.totalorder %s22, 0
      %s301 = scalar_select %p300, %s22, 0
      %s302 = sadd.s32 %s301, %s299
      %s303 = smul.addr %s297, 8
      %s304 = sadd.s32 %s302, %s303
      %s305 = smul.addr %s304, 8
      %s306 = scalar_lea.vmem %s3, %s305
      %p307 = scmp.lt.s32.totalorder %s21, 1
      %s308 = scalar_select %p307, %s21, 1
      %p309 = scmp.lt.s32.totalorder %s23, 7
      %s310 = scalar_select %p309, %s23, 7
      %p311 = scmp.lt.s32.totalorder %s22, 0
      %s312 = scalar_select %p311, %s22, 0
      %s313 = sadd.s32 %s312, %s310
      %s314 = smul.addr %s308, 8
      %s315 = sadd.s32 %s313, %s314
      %s316 = smul.addr %s315, 8
      %s317 = scalar_lea.vmem %s4, %s316
      %v318 = vld [vmem:[%s279] sm:$0xff]
      %v319 = vld [vmem:[%s284] sm:$0xff]
      %v320 = vld [vmem:[%s284 + $0x8] sm:$0xff]
      %v321 = vld [vmem:[%s284 + $0x10] sm:$0xff]
      %v322 = vld [vmem:[%s284 + $0x18] sm:$0xff]
      %vm323 = vcmask 261120
      %v325 = vsel %vm323, %v318, 0
      %327 = vmatprep.subr.mxu0 0.0
      %328 = vmatpush1.msra.mxu0 0.0
      %329 = vmatprep.subr.mxu0 0.0
      %330 = vmatpush1.msra.mxu0 0.0
      %331 = vmatprep.subr.mxu0 0.0
      %332 = vmatpush1.msra.mxu0 0.0
      %333 = vmatprep.subr.mxu0 0.0
      %334 = vmatpush1.msra.mxu0 0.0
      %335 = vmatprep.subr.mxu0 0.0
      %336 = vmatpush1.msra.mxu0 0.0
      %337 = vmatprep.subr.mxu0 0.0
      %338 = vmatpush1.msra.mxu0 0.0
      %339 = vmatprep.subr.mxu0 0.0
      %340 = vmatpush1.msra.mxu0 0.0
      %341 = vmatprep.subr.mxu0 0.0
      %342 = vmatpush1.msra.mxu0 0.0
      %343 = vmatprep.subr.mxu0 0.0
      %344 = vmatpush1.msra.mxu0 0.0
      %345 = vmatprep.subr.mxu0 0.0
      %346 = vmatpush1.msra.mxu0 0.0
      %347 = vmatprep.subr.mxu0 0.0
      %348 = vmatpush1.msra.mxu0 0.0
      %349 = vmatprep.subr.mxu0 0.0
      %350 = vmatpush1.msra.mxu0 0.0
      %351 = vmatprep.subr.mxu0 0.0
      %352 = vmatpush1.msra.mxu0 %v322
      %353 = vmatprep.subr.mxu0 0.0
      %354 = vmatpush1.msra.mxu0 %v321
      %355 = vmatprep.subr.mxu0 0.0
      %356 = vmatpush1.msra.mxu0 %v320
      %357 = vmatprep.subr.mxu0 0.0
      %358 = vmatpush1.msra.mxu0 %v319
      %359 = vmatprep.subr.mxu0 0.0
      %360 = vmatpush2.msra.mxu0 0.0
      %361 = vmatprep.subr.mxu0 0.0
      %362 = vmatpush2.msra.mxu0 0.0
      %363 = vmatprep.subr.mxu0 0.0
      %364 = vmatpush2.msra.mxu0 0.0
      %365 = vmatprep.subr.mxu0 0.0
      %366 = vmatpush2.msra.mxu0 0.0
      %367 = vmatprep.subr.mxu0 0.0
      %368 = vmatpush2.msra.mxu0 0.0
      %369 = vmatprep.subr.mxu0 0.0
      %370 = vmatpush2.msra.mxu0 0.0
      %371 = vmatprep.subr.mxu0 0.0
      %372 = vmatpush2.msra.mxu0 0.0
      %373 = vmatprep.subr.mxu0 0.0
      %374 = vmatpush2.msra.mxu0 0.0
      %375 = vmatprep.subr.mxu0 0.0
      %376 = vmatpush2.msra.mxu0 0.0
      %377 = vmatprep.subr.mxu0 0.0
      %378 = vmatpush2.msra.mxu0 0.0
      %379 = vmatprep.subr.mxu0 0.0
      %380 = vmatpush2.msra.mxu0 0.0
      %381 = vmatprep.subr.mxu0 0.0
      %382 = vmatpush2.msra.mxu0 0.0
      %383 = vmatprep.subr.mxu0 0.0
      %384 = vmatpush2.msra.mxu0 0.0
      %385 = vmatprep.subr.mxu0 0.0
      %386 = vmatpush2.msra.mxu0 0.0
      %387 = vmatprep.subr.mxu0 0.0
      %388 = vmatpush2.msra.mxu0 0.0
      %389 = vmatprep.subr.mxu0 0.0
      %390 = vmatpush2.msra.mxu0 0.0
      %391 = vmatprep.mubr.f32.mxu0 0.0
      %392 = vmatmul.mubr.f32.gmra.mxu0 %v325
      %v393 = vpop.f32.mrf.mxu0
      %v394 = vadd.f32 0.0, %v393
      %v395 = vpop.f32.mrf.mxu0
      %396 = vdwg.mxu0
      %vm397 = vcmask 31744
      %398 = vst.msk [vmem:[%s295] sm:$0xff] %vm397, %v394
      %400 = vrot.lane.b32.xlu0 %v394, 124
      %v401 = vpop.permute.xlu0 %400
      %403 = vst.msk [vmem:[%s306] sm:$0xff] %vm397, %v401
      %404 = vrot.lane.b32.xlu0 %v394, 120
      %v405 = vpop.permute.xlu0 %404
      %407 = vst.msk [vmem:[%s317] sm:$0xff] %vm397, %v405
      %p408 = scmp.lt.s32.totalorder %s21, 1
      %s409 = scalar_select %p408, %s21, 1
      %p410 = scmp.lt.s32.totalorder %s23, 7
      %s411 = scalar_select %p410, %s23, 7
      %p412 = scmp.lt.s32.totalorder %s22, 0
      %s413 = scalar_select %p412, %s22, 0
      %s414 = sadd.s32 %s413, %s411
      %s415 = smul.addr %s409, 8
      %s416 = sadd.s32 %s414, %s415
      %s417 = smul.addr %s416, 8
      %s418 = scalar_lea.vmem %s2, %s417
      %p419 = scmp.lt.s32.totalorder %s21, 1
      %s420 = scalar_select %p419, %s21, 1
      %p421 = scmp.lt.s32.totalorder %s23, 7
      %s422 = scalar_select %p421, %s23, 7
      %p423 = scmp.lt.s32.totalorder %s22, 0
      %s424 = scalar_select %p423, %s22, 0
      %s425 = sadd.s32 %s424, %s422
      %s426 = smul.addr %s420, 8
      %s427 = sadd.s32 %s425, %s426
      %s428 = smul.addr %s427, 8
      %s429 = scalar_lea.vmem %s3, %s428
      %p430 = scmp.lt.s32.totalorder %s21, 1
      %s431 = scalar_select %p430, %s21, 1
      %p432 = scmp.lt.s32.totalorder %s23, 7
      %s433 = scalar_select %p432, %s23, 7
      %p434 = scmp.lt.s32.totalorder %s22, 0
      %s435 = scalar_select %p434, %s22, 0
      %s436 = sadd.s32 %s435, %s433
      %s437 = smul.addr %s431, 8
      %s438 = sadd.s32 %s436, %s437
      %s439 = smul.addr %s438, 8
      %s440 = scalar_lea.vmem %s4, %s439
      // Predicated region
      $region29: #{attention_pallas.2} parent=27 // pred_check
        %p441 = pneg %p111
      $region30: #{attention_pallas.2} parent=27 // pred_check_branch
        %443 = sbr.rel (%p441) target = $region32
      $region31: #{attention_pallas.2} parent=27 // pred_region
        _
      $region32: #{attention_pallas.2} parent=27 // pred_fallthru
        _
      // Predicated region
      $region33: #{attention_pallas.2} parent=27 // pred_check
        %p444 = pneg %p141
      $region34: #{attention_pallas.2} parent=27 // pred_check_branch
        %446 = sbr.rel (%p444) target = $region36
      $region35: #{attention_pallas.2} parent=27 // pred_region
        _
      $region36: #{attention_pallas.2} parent=27 // pred_fallthru
        _
      // Predicated region
      $region37: #{attention_pallas.2} parent=27 // pred_check
        %p447 = pneg %p171
      $region38: #{attention_pallas.2} parent=27 // pred_check_branch
        %449 = sbr.rel (%p447) target = $region40
      $region39: #{attention_pallas.2} parent=27 // pred_region
        _
      $region40: #{attention_pallas.2} parent=27 // pred_fallthru
        _
    $region28: #{attention_pallas.2} parent=5 // pred_fallthru
      _
    %p450 = scmp.le.s32.totalorder 2, %s11
    // Predicated region
    $region41: #{attention_pallas.2} parent=5 // pred_check
      %p451 = pneg %p450
    $region42: #{attention_pallas.2} parent=5 // pred_check_branch
      %453 = sbr.rel (%p451) target = $region44
    $region43: #{attention_pallas.2} parent=5 // pred_region
      %s454 = ssub.s32 %s11, 2
      // Predicated region
      $region45: #{attention_pallas.2} parent=43 // pred_check
        %p455 = pneg %p117
      $region46: #{attention_pallas.2} parent=43 // pred_check_branch
        %457 = sbr.rel (%p455) target = $region48
      $region47: #{attention_pallas.2} parent=43 // pred_region
        %p458 = scmp.lt.s32.totalorder %s24, 1
        %s459 = scalar_select %p458, %s24, 1
        %p460 = scmp.lt.s32.totalorder %s26, 7
        %s461 = scalar_select %p460, %s26, 7
        %p462 = scmp.lt.s32.totalorder %s25, 0
        %s463 = scalar_select %p462, %s25, 0
        %s464 = sadd.s32 %s463, %s461
        %s465 = smul.addr %s459, 8
        %s466 = sadd.s32 %s464, %s465
        %s467 = smul.addr %s466, 8
        %s468 = scalar_lea.vmem %s2, %s467
      $region48: #{attention_pallas.2} parent=43 // pred_fallthru
        _
      // Predicated region
      $region49: #{attention_pallas.2} parent=43 // pred_check
        %p469 = pneg %p147
      $region50: #{attention_pallas.2} parent=43 // pred_check_branch
        %471 = sbr.rel (%p469) target = $region52
      $region51: #{attention_pallas.2} parent=43 // pred_region
        %p472 = scmp.lt.s32.totalorder %s24, 1
        %s473 = scalar_select %p472, %s24, 1
        %p474 = scmp.lt.s32.totalorder %s26, 7
        %s475 = scalar_select %p474, %s26, 7
        %p476 = scmp.lt.s32.totalorder %s25, 0
        %s477 = scalar_select %p476, %s25, 0
        %s478 = sadd.s32 %s477, %s475
        %s479 = smul.addr %s473, 8
        %s480 = sadd.s32 %s478, %s479
        %s481 = smul.addr %s480, 8
        %s482 = scalar_lea.vmem %s3, %s481
      $region52: #{attention_pallas.2} parent=43 // pred_fallthru
        _
      // Predicated region
      $region53: #{attention_pallas.2} parent=43 // pred_check
        %p483 = pneg %p177
      $region54: #{attention_pallas.2} parent=43 // pred_check_branch
        %485 = sbr.rel (%p483) target = $region56
      $region55: #{attention_pallas.2} parent=43 // pred_region
        %p486 = scmp.lt.s32.totalorder %s24, 1
        %s487 = scalar_select %p486, %s24, 1
        %p488 = scmp.lt.s32.totalorder %s26, 7
        %s489 = scalar_select %p488, %s26, 7
        %p490 = scmp.lt.s32.totalorder %s25, 0
        %s491 = scalar_select %p490, %s25, 0
        %s492 = sadd.s32 %s491, %s489
        %s493 = smul.addr %s487, 8
        %s494 = sadd.s32 %s492, %s493
        %s495 = smul.addr %s494, 8
        %s496 = scalar_lea.vmem %s4, %s495
      $region56: #{attention_pallas.2} parent=43 // pred_fallthru
        _
    $region44: #{attention_pallas.2} parent=5 // pred_fallthru
      _
  $region6: #{attention_pallas.2} parent=0 // loop_footer
    %s15 = sadd.s32 1, %s11
  $region7: #{attention_pallas.2} parent=0 // loop_footer_branch
    %10 = sbr.rel target = $region3
  $region8: #{attention_pallas.2} parent=0 // loop_exit
    _

// kernel: attention_pallas.3
$region0: #{attention_pallas.3}
  #allocation0 [shape = 'u32[]', space=smem, size = 0x4, offset = 0x4, fixed_abs, tag = 'smem constant byte address 0x4 - core index']
  #allocation1 [shape = 'u32[144,128]{1,0:T(1,128)}', space=vmem, size = 0x12000, scoped, tag = 'internal scratch']
  #allocation2 [shape = 'f32[8,1]{1,0:T(8,128)}', space=vmem, size = 0x1000, scoped, tag = 'scratch operand']
  #allocation3 [shape = 'f32[8,1]{1,0:T(8,128)}', space=vmem, size = 0x1000, scoped, tag = 'scratch operand']
  #allocation4 [shape = 'f32[8,4]{1,0:T(8,128)}', space=vmem, size = 0x1000, scoped, tag = 'scratch operand']
  #allocation5 [shape = 'f32[8,32]{1,0:T(8,128)}', space=vmem, size = 0x1000, scoped, tag = 'scratch operand']
  %s0 = inlined_call_operand.vmem [shape: f32[2,8,8,4], index: 0, kind: input, shape index: {}]
  %s1 = inlined_call_operand.vmem [shape: f32[2,8,8,4], index: 1, kind: input, shape index: {}]
  %s2 = inlined_call_operand.vmem [shape: f32[2,8,8,4], index: 2, kind: input, shape index: {}]
  %s3 = inlined_call_operand.vmem [shape: f32[8,4,32], index: 3, kind: input, shape index: {}]
  %s4 = inlined_call_operand.vmem [shape: f32[1,32], index: 4, kind: input, shape index: {}]
  %s5 = inlined_call_operand.hbm [shape: f32[2,8,32], index: 5, kind: output, shape index: {}]
  %s6 = sld [smem:[#allocation0]]
  $region69: #{attention_pallas.3} parent=0
    _
  %s8 = ssub.s32 1, %s6
  %s9 = scalar_select 0, %s8, %s6
  $region1: #{attention_pallas.3} parent=0
    #allocation6 [shape = 'u8[8192]{0}', space=vmem, size = 0x2000, scoped, tag = 'output window, operand 0']
    #allocation7 [shape = 's32[2]{0}', space=sflag, size = 0x8, scoped, tag = 'scoped memory for attention_pallas.3']
    %10 = vsyncpa [#allocation7], 0
    %s11 = scalar_lea.sflag [#allocation7], 1
    %12 = vsyncpa %s11, 0
    loop: start=0, step=1, limit=18
    $region2: #{attention_pallas.3} parent=1 // loop_pre_header
      _
    $region3: #{attention_pallas.3} parent=1 // loop_header
      %s14 = sphi 0, %s18
      %p15 = scmp.ge.s32.totalorder %s14, 18
      %s21 = sphi 0, %s47
      %s22 = sphi 0, %s43
      %s23 = sphi 0, %s39
      %s24 = sphi 0, %s35
      %s25 = sphi 0, %s21
      %s26 = sphi 0, %s22
      %s27 = sphi 0, %s23
      %s28 = sphi 0, %s24
      %s29 = sphi 0, %s25
      %s30 = sphi 0, %s26
      %s31 = sphi 0, %s27
      %s32 = sphi 0, %s28
      %s54 = sphi 0, %s56
      %s57 = sphi 0, %s54
      %s58 = sphi 0, %s57
      %s74 = sphi 0, %s58
      %s84 = sphi 0, %s86
      %s87 = sphi 0, %s84
      %s88 = sphi 0, %s87
      %s104 = sphi 0, %s88
      %s114 = sphi 0, %s116
      %s117 = sphi 0, %s114
      %s118 = sphi 0, %s117
      %s134 = sphi 0, %s118
      %s138 = sphi 0, %s138
      %s140 = sphi 0, %s138
      %s141 = sphi 0, %s140
      %s155 = sphi 0, %s141
      %s159 = sphi 0, %s159
      %s161 = sphi 0, %s159
      %s162 = sphi 0, %s161
      %s176 = sphi 0, %s162
      %s184 = sphi 0, %s186
      %s187 = sphi 0, %s184
      %s188 = sphi 0, %s187
      %s204 = sphi 0, %s188
    $region4: #{attention_pallas.3} parent=1 // loop_header_branch
      %17 = sbr.rel (%p15) target = $region8
    $region5: #{attention_pallas.3} parent=1 // loop_body
      %s19 = ssub.s32 %s14, 1
      %s20 = ssub.s32 %s14, 2
      %s33 = sadd.s32 1, %s24
      %p34 = scmp.ge.s32.totalorder %s33, 1
      %s35 = scalar_select %p34, 0, %s33
      %s36 = sadd.s32 1, %s23
      %s37 = scalar_select %p34, %s36, %s23
      %p38 = scmp.ge.s32.totalorder %s37, 8
      %s39 = scalar_select %p38, 0, %s37
      %s40 = sadd.s32 1, %s22
      %s41 = scalar_select %p38, %s40, %s22
      %p42 = scmp.ge.s32.totalorder %s41, 1
      %s43 = scalar_select %p42, 0, %s41
      %s44 = sadd.s32 1, %s21
      %s45 = scalar_select %p42, %s44, %s21
      %p46 = scmp.ge.s32.totalorder %s45, 2
      %s47 = scalar_select %p46, 0, %s45
      %s48 = ssub.s32 %s21, %s47
      %s49 = ssub.s32 %s23, %s39
      %s50 = sor.u32 %s48, %s49
      %s51 = ssub.s32 %s22, %s43
      %s52 = sor.u32 %s50, %s51
      %p53 = scmp.eq.s32.totalorder %s52, 0
      %s55 = sadd.s32 %s54, 1
      %s56 = scalar_select %p53, %s54, %s55
      %p59 = pneg %p53
      %p60 = scmp.eq.s32.totalorder %s14, 15
      %p61 = por %p59, %p60
      %p62 = scmp.ne.s32.totalorder %s54, %s57
      %p63 = scmp.eq.s32.totalorder %s14, 0
      %p64 = por %p62, %p63
      %p65 = scmp.ne.s32.totalorder %s54, %s57
      %p66 = scmp.eq.s32.totalorder %s19, 15
      %p67 = por %p65, %p66
      %p68 = scmp.ne.s32.totalorder %s57, %s58
      %p69 = scmp.eq.s32.totalorder %s19, 0
      %p70 = por %p68, %p69
      %p71 = scmp.ne.s32.totalorder %s57, %s58
      %p72 = scmp.eq.s32.totalorder %s20, 15
      %p73 = por %p71, %p72
      %p75 = scmp.ne.s32.totalorder %s58, %s74
      %p76 = scmp.eq.s32.totalorder %s20, 0
      %p77 = por %p75, %p76
      %s78 = ssub.s32 %s21, %s47
      %s79 = ssub.s32 %s23, %s39
      %s80 = sor.u32 %s78, %s79
      %s81 = ssub.s32 %s24, %s35
      %s82 = sor.u32 %s80, %s81
      %p83 = scmp.eq.s32.totalorder %s82, 0
      %s85 = sadd.s32 %s84, 1
      %s86 = scalar_select %p83, %s84, %s85
      %p89 = pneg %p83
      %p90 = scmp.eq.s32.totalorder %s14, 15
      %p91 = por %p89, %p90
      %p92 = scmp.ne.s32.totalorder %s84, %s87
      %p93 = scmp.eq.s32.totalorder %s14, 0
      %p94 = por %p92, %p93
      %p95 = scmp.ne.s32.totalorder %s84, %s87
      %p96 = scmp.eq.s32.totalorder %s19, 15
      %p97 = por %p95, %p96
      %p98 = scmp.ne.s32.totalorder %s87, %s88
      %p99 = scmp.eq.s32.totalorder %s19, 0
      %p100 = por %p98, %p99
      %p101 = scmp.ne.s32.totalorder %s87, %s88
      %p102 = scmp.eq.s32.totalorder %s20, 15
      %p103 = por %p101, %p102
      %p105 = scmp.ne.s32.totalorder %s88, %s104
      %p106 = scmp.eq.s32.totalorder %s20, 0
      %p107 = por %p105, %p106
      %s108 = ssub.s32 %s21, %s47
      %s109 = ssub.s32 %s23, %s39
      %s110 = sor.u32 %s108, %s109
      %s111 = ssub.s32 %s24, %s35
      %s112 = sor.u32 %s110, %s111
      %p113 = scmp.eq.s32.totalorder %s112, 0
      %s115 = sadd.s32 %s114, 1
      %s116 = scalar_select %p113, %s114, %s115
      %p119 = pneg %p113
      %p120 = scmp.eq.s32.totalorder %s14, 15
      %p121 = por %p119, %p120
      %p122 = scmp.ne.s32.totalorder %s114, %s117
      %p123 = scmp.eq.s32.totalorder %s14, 0
      %p124 = por %p122, %p123
      %p125 = scmp.ne.s32.totalorder %s114, %s117
      %p126 = scmp.eq.s32.totalorder %s19, 15
      %p127 = por %p125, %p126
      %p128 = scmp.ne.s32.totalorder %s117, %s118
      %p129 = scmp.eq.s32.totalorder %s19, 0
      %p130 = por %p128, %p129
      %p131 = scmp.ne.s32.totalorder %s117, %s118
      %p132 = scmp.eq.s32.totalorder %s20, 15
      %p133 = por %p131, %p132
      %p135 = scmp.ne.s32.totalorder %s118, %s134
      %p136 = scmp.eq.s32.totalorder %s20, 0
      %p137 = por %p135, %p136
      %s139 = sadd.s32 %s138, 1
      %p142 = scmp.eq.s32.totalorder %s14, 15
      %p143 = scmp.ne.s32.totalorder %s138, %s140
      %p144 = scmp.eq.s32.totalorder %s14, 0
      %p145 = por %p143, %p144
      %p146 = scmp.ne.s32.totalorder %s138, %s140
      %p147 = scmp.eq.s32.totalorder %s19, 15
      %p148 = por %p146, %p147
      %p149 = scmp.ne.s32.totalorder %s140, %s141
      %p150 = scmp.eq.s32.totalorder %s19, 0
      %p151 = por %p149, %p150
      %p152 = scmp.ne.s32.totalorder %s140, %s141
      %p153 = scmp.eq.s32.totalorder %s20, 15
      %p154 = por %p152, %p153
      %p156 = scmp.ne.s32.totalorder %s141, %s155
      %p157 = scmp.eq.s32.totalorder %s20, 0
      %p158 = por %p156, %p157
      %s160 = sadd.s32 %s159, 1
      %p163 = scmp.eq.s32.totalorder %s14, 15
      %p164 = scmp.ne.s32.totalorder %s159, %s161
      %p165 = scmp.eq.s32.totalorder %s14, 0
      %p166 = por %p164, %p165
      %p167 = scmp.ne.s32.totalorder %s159, %s161
      %p168 = scmp.eq.s32.totalorder %s19, 15
      %p169 = por %p167, %p168
      %p170 = scmp.ne.s32.totalorder %s161, %s162
      %p171 = scmp.eq.s32.totalorder %s19, 0
      %p172 = por %p170, %p171
      %p173 = scmp.ne.s32.totalorder %s161, %s162
      %p174 = scmp.eq.s32.totalorder %s20, 15
      %p175 = por %p173, %p174
      %p177 = scmp.ne.s32.totalorder %s162, %s176
      %p178 = scmp.eq.s32.totalorder %s20, 0
      %p179 = por %p177, %p178
      %s180 = ssub.s32 %s21, %s47
      %s181 = ssub.s32 %s22, %s43
      %s182 = sor.u32 %s180, %s181
      %p183 = scmp.eq.s32.totalorder %s182, 0
      %s185 = sadd.s32 %s184, 1
      %s186 = scalar_select %p183, %s184, %s185
      %p189 = pneg %p183
      %p190 = scmp.eq.s32.totalorder %s14, 15
      %p191 = por %p189, %p190
      %p192 = scmp.ne.s32.totalorder %s184, %s187
      %p193 = scmp.eq.s32.totalorder %s14, 0
      %p194 = por %p192, %p193
      %p195 = scmp.ne.s32.totalorder %s184, %s187
      %p196 = scmp.eq.s32.totalorder %s19, 15
      %p197 = por %p195, %p196
      %p198 = scmp.ne.s32.totalorder %s187, %s188
      %p199 = scmp.eq.s32.totalorder %s19, 0
      %p200 = por %p198, %p199
      %p201 = scmp.ne.s32.totalorder %s187, %s188
      %p202 = scmp.eq.s32.totalorder %s20, 15
      %p203 = por %p201, %p202
      %p205 = scmp.ne.s32.totalorder %s188, %s204
      %p206 = scmp.eq.s32.totalorder %s20, 0
      %p207 = por %p205, %p206
      %p208 = scmp.le.s32.totalorder 1, %s14
      %p209 = scmp.lt.s32.totalorder %s14, 17
      %p210 = pnand %p208, %p209
      %p211 = pneg %p210
      // Predicated region
      $region9: #{attention_pallas.3} parent=5 // pred_check
        _
      $region10: #{attention_pallas.3} parent=5 // pred_check_branch
        %213 = sbr.rel (%p210) target = $region12
      $region11: #{attention_pallas.3} parent=5 // pred_region
        %s214 = ssub.s32 %s14, 1
        // Predicated region
        $region13: #{attention_pallas.3} parent=11 // pred_check
          %p215 = pneg %p151
        $region14: #{attention_pallas.3} parent=11 // pred_check_branch
          %217 = sbr.rel (%p215) target = $region16
        $region15: #{attention_pallas.3} parent=11 // pred_region
          _
        $region16: #{attention_pallas.3} parent=11 // pred_fallthru
          _
        // Predicated region
        $region17: #{attention_pallas.3} parent=11 // pred_check
          %p218 = pneg %p172
        $region18: #{attention_pallas.3} parent=11 // pred_check_branch
          %220 = sbr.rel (%p218) target = $region20
        $region19: #{attention_pallas.3} parent=11 // pred_region
          _
        $region20: #{attention_pallas.3} parent=11 // pred_fallthru
          _
      $region12: #{attention_pallas.3} parent=5 // pred_fallthru
        _
      %p221 = scmp.lt.s32.totalorder %s14, 16
      // Predicated region
      $region21: #{attention_pallas.3} parent=5 // pred_check
        %p222 = pneg %p221
      $region22: #{attention_pallas.3} parent=5 // pred_check_branch
        %224 = sbr.rel (%p222) target = $region24
      $region23: #{attention_pallas.3} parent=5 // pred_region
        // Predicated region
        $region25: #{attention_pallas.3} parent=23 // pred_check
          %p225 = pneg %p64
        $region26: #{attention_pallas.3} parent=23 // pred_check_branch
          %227 = sbr.rel (%p225) target = $region28
        $region27: #{attention_pallas.3} parent=23 // pred_region
          %p228 = scmp.lt.s32.totalorder %s21, 1
          %s229 = scalar_select %p228, %s21, 1
          %p230 = scmp.lt.s32.totalorder %s23, 7
          %s231 = scalar_select %p230, %s23, 7
          %p232 = scmp.lt.s32.totalorder %s22, 0
          %s233 = scalar_select %p232, %s22, 0
          %s234 = sadd.s32 %s233, %s231
          %s235 = smul.addr %s229, 8
          %s236 = sadd.s32 %s234, %s235
          %s237 = smul.addr %s236, 8
          %s238 = scalar_lea.vmem %s0, %s237
        $region28: #{attention_pallas.3} parent=23 // pred_fallthru
          _
        // Predicated region
        $region29: #{attention_pallas.3} parent=23 // pred_check
          %p239 = pneg %p94
        $region30: #{attention_pallas.3} parent=23 // pred_check_branch
          %241 = sbr.rel (%p239) target = $region32
        $region31: #{attention_pallas.3} parent=23 // pred_region
          %p242 = scmp.lt.s32.totalorder %s21, 1
          %s243 = scalar_select %p242, %s21, 1
          %p244 = scmp.lt.s32.totalorder %s23, 7
          %s245 = scalar_select %p244, %s23, 7
          %p246 = scmp.lt.s32.totalorder %s24, 0
          %s247 = scalar_select %p246, %s24, 0
          %s248 = sadd.s32 %s247, %s245
          %s249 = smul.addr %s243, 8
          %s250 = sadd.s32 %s248, %s249
          %s251 = smul.addr %s250, 8
          %s252 = scalar_lea.vmem %s1, %s251
        $region32: #{attention_pallas.3} parent=23 // pred_fallthru
          _
        // Predicated region
        $region33: #{attention_pallas.3} parent=23 // pred_check
          %p253 = pneg %p124
        $region34: #{attention_pallas.3} parent=23 // pred_check_branch
          %255 = sbr.rel (%p253) target = $region36
        $region35: #{attention_pallas.3} parent=23 // pred_region
          %p256 = scmp.lt.s32.totalorder %s21, 1
          %s257 = scalar_select %p256, %s21, 1
          %p258 = scmp.lt.s32.totalorder %s23, 7
          %s259 = scalar_select %p258, %s23, 7
          %p260 = scmp.lt.s32.totalorder %s24, 0
          %s261 = scalar_select %p260, %s24, 0
          %s262 = sadd.s32 %s261, %s259
          %s263 = smul.addr %s257, 8
          %s264 = sadd.s32 %s262, %s263
          %s265 = smul.addr %s264, 8
          %s266 = scalar_lea.vmem %s2, %s265
        $region36: #{attention_pallas.3} parent=23 // pred_fallthru
          _
      $region24: #{attention_pallas.3} parent=5 // pred_fallthru
        _
      %p267 = scmp.le.s32.totalorder 1, %s14
      %p268 = scmp.lt.s32.totalorder %s14, 17
      %p269 = pnand %p267, %p268
      %p270 = pneg %p269
      // Predicated region
      $region37: #{attention_pallas.3} parent=5 // pred_check
        _
      $region38: #{attention_pallas.3} parent=5 // pred_check_branch
        %272 = sbr.rel (%p269) target = $region40
      $region39: #{attention_pallas.3} parent=5 // pred_region
        %s273 = ssub.s32 %s14, 1
        %p274 = scmp.lt.s32.totalorder %s25, 1
        %s275 = scalar_select %p274, %s25, 1
        %p276 = scmp.lt.s32.totalorder %s27, 7
        %s277 = scalar_select %p276, %s27, 7
        %p278 = scmp.lt.s32.totalorder %s26, 0
        %s279 = scalar_select %p278, %s26, 0
        %s280 = sadd.s32 %s279, %s277
        %s281 = smul.addr %s275, 8
        %s282 = sadd.s32 %s280, %s281
        %s283 = smul.addr %s282, 8
        %s284 = scalar_lea.vmem %s0, %s283
        %p285 = pneg %p70
        %p286 = pneg %p67
        %p287 = scmp.lt.s32.totalorder %s25, 1
        %s288 = scalar_select %p287, %s25, 1
        %p289 = scmp.lt.s32.totalorder %s27, 7
        %s290 = scalar_select %p289, %s27, 7
        %p291 = scmp.lt.s32.totalorder %s28, 0
        %s292 = scalar_select %p291, %s28, 0
        %s293 = sadd.s32 %s292, %s290
        %s294 = smul.addr %s288, 8
        %s295 = sadd.s32 %s293, %s294
        %s296 = smul.addr %s295, 8
        %s297 = scalar_lea.vmem %s1, %s296
        %p298 = pneg %p100
        %p299 = pneg %p97
        %p300 = scmp.lt.s32.totalorder %s25, 1
        %s301 = scalar_select %p300, %s25, 1
        %p302 = scmp.lt.s32.totalorder %s27, 7
        %s303 = scalar_select %p302, %s27, 7
        %p304 = scmp.lt.s32.totalorder %s28, 0
        %s305 = scalar_select %p304, %s28, 0
        %s306 = sadd.s32 %s305, %s303
        %s307 = smul.addr %s301, 8
        %s308 = sadd.s32 %s306, %s307
        %s309 = smul.addr %s308, 8
        %s310 = scalar_lea.vmem %s2, %s309
        %p311 = pneg %p130
        %p312 = pneg %p127
        %p313 = pneg %p151
        %p314 = pneg %p148
        %p315 = pneg %p172
        %p316 = pneg %p169
        %p317 = pneg %p200
        %p318 = pneg %p197
        %s319 = sand.u32 %s187, 1
        %s320 = scalar_lea.sflag [#allocation7], %s319
        %s321 = sand.u32 %s187, 1
        %s322 = smul.addr %s321, 8
        %s323 = scalar_lea.vmem [#allocation6], %s322
        %p324 = scmp.lt.s32.totalorder %s25, 1
        %s325 = scalar_select %p324, %s25, 1
        %p326 = scmp.lt.s32.totalorder %s27, 7
        %s327 = scalar_select %p326, %s27, 7
        %p328 = scmp.lt.s32.totalorder %s26, 0
        %s329 = scalar_select %p328, %s26, 0
        %s330 = sadd.s32 %s329, %s327
        %s331 = smul.addr %s325, 8
        %s332 = sadd.s32 %s330, %s331
        %s333 = smul.addr %s332, 8
        %s334 = scalar_lea.vmem %s0, %s333
        %p335 = scmp.lt.s32.totalorder %s25, 1
        %s336 = scalar_select %p335, %s25, 1
        %p337 = scmp.lt.s32.totalorder %s27, 7
        %s338 = scalar_select %p337, %s27, 7
        %p339 = scmp.lt.s32.totalorder %s28, 0
        %s340 = scalar_select %p339, %s28, 0
        %s341 = sadd.s32 %s340, %s338
        %s342 = smul.addr %s336, 8
        %s343 = sadd.s32 %s341, %s342
        %s344 = smul.addr %s343, 8
        %s345 = scalar_lea.vmem %s1, %s344
        %p346 = scmp.lt.s32.totalorder %s25, 1
        %s347 = scalar_select %p346, %s25, 1
        %p348 = scmp.lt.s32.totalorder %s27, 7
        %s349 = scalar_select %p348, %s27, 7
        %p350 = scmp.lt.s32.totalorder %s28, 0
        %s351 = scalar_select %p350, %s28, 0
        %s352 = sadd.s32 %s351, %s349
        %s353 = smul.addr %s347, 8
        %s354 = sadd.s32 %s352, %s353
        %s355 = smul.addr %s354, 8
        %s356 = scalar_lea.vmem %s2, %s355
        %p357 = scmp.eq.s32.totalorder %s27, 0
        %p358 = scmp.eq.s32.totalorder %s28, 0
        %p359 = pnand %p357, %p358
        %p360 = pneg %p359
        // Predicated region
        $region41: #{attention_pallas.3} parent=39 // pred_check
          _
        $region42: #{attention_pallas.3} parent=39 // pred_check_branch
          %362 = sbr.rel (%p359) target = $region44
        $region43: #{attention_pallas.3} parent=39 // pred_region
          %vm363 = vcmask 261120
          %364 = vst.msk [vmem:[#allocation5] sm:$0xff] %vm363, 0.0
        $region44: #{attention_pallas.3} parent=39 // pred_fallthru
          _
        // Predicated region
        $region45: #{attention_pallas.3} parent=39 // pred_check
          %p365 = pneg %p358
        $region46: #{attention_pallas.3} parent=39 // pred_check_branch
          %367 = sbr.rel (%p365) target = $region48
        $region47: #{attention_pallas.3} parent=39 // pred_region
          %vm368 = vcmask 7168
          %369 = vst.msk [vmem:[#allocation2] sm:$0xff] %vm368, -inf
          %370 = vst.msk [vmem:[#allocation3] sm:$0xff] %vm368, 0.0
          %vm371 = vcmask 31744
          %372 = vst.msk [vmem:[#allocation4] sm:$0xff] %vm371, 0.0
        $region48: #{attention_pallas.3} parent=39 // pred_fallthru
          _
        %v373 = vld [vmem:[%s334] sm:$0xff]
        %v374 = vld [vmem:[%s345] sm:$0xff]
        %v375 = vld [vmem:[%s356] sm:$0xff]
        %vm376 = vcmask 31744
        %v378 = vsel %vm376, %v373, 0
        %v381 = vsel %vm376, %v374, 0
        %383 = vmatprep.subr.mxu0 0.0
        %384 = vmatpush1.xpose.msra.mxu0 0.0
        %385 = vmatprep.subr.mxu0 0.0
        %386 = vmatpush1.xpose.msra.mxu0 0.0
        %387 = vmatprep.subr.mxu0 0.0
        %388 = vmatpush1.xpose.msra.mxu0 0.0
        %389 = vmatprep.subr.mxu0 0.0
        %390 = vmatpush1.xpose.msra.mxu0 0.0
        %391 = vmatprep.subr.mxu0 0.0
        %392 = vmatpush1.xpose.msra.mxu0 0.0
        %393 = vmatprep.subr.mxu0 0.0
        %394 = vmatpush1.xpose.msra.mxu0 0.0
        %395 = vmatprep.subr.mxu0 0.0
        %396 = vmatpush1.xpose.msra.mxu0 0.0
        %397 = vmatprep.subr.mxu0 0.0
        %398 = vmatpush1.xpose.msra.mxu0 0.0
        %399 = vmatprep.subr.mxu0 0.0
        %400 = vmatpush1.xpose.msra.mxu0 0.0
        %401 = vmatprep.subr.mxu0 0.0
        %402 = vmatpush1.xpose.msra.mxu0 0.0
        %403 = vmatprep.subr.mxu0 0.0
        %404 = vmatpush1.xpose.msra.mxu0 0.0
        %405 = vmatprep.subr.mxu0 0.0
        %406 = vmatpush1.xpose.msra.mxu0 0.0
        %407 = vmatprep.subr.mxu0 0.0
        %408 = vmatpush1.xpose.msra.mxu0 0.0
        %409 = vmatprep.subr.mxu0 0.0
        %410 = vmatpush1.xpose.msra.mxu0 0.0
        %411 = vmatprep.subr.mxu0 0.0
        %412 = vmatpush1.xpose.msra.mxu0 0.0
        %413 = vmatprep.subr.mxu0 0.0
        %414 = vmatpush1.xpose.msra.mxu0 %v381
        %415 = vmatprep.subr.mxu0 0.0
        %416 = vmatpush2.xpose.msra.mxu0 0.0
        %417 = vmatprep.subr.mxu0 0.0
        %418 = vmatpush2.xpose.msra.mxu0 0.0
        %419 = vmatprep.subr.mxu0 0.0
        %420 = vmatpush2.xpose.msra.mxu0 0.0
        %421 = vmatprep.subr.mxu0 0.0
        %422 = vmatpush2.xpose.msra.mxu0 0.0
        %423 = vmatprep.subr.mxu0 0.0
        %424 = vmatpush2.xpose.msra.mxu0 0.0
        %425 = vmatprep.subr.mxu0 0.0
        %426 = vmatpush2.xpose.msra.mxu0 0.0
        %427 = vmatprep.subr.mxu0 0.0
        %428 = vmatpush2.xpose.msra.mxu0 0.0
        %429 = vmatprep.subr.mxu0 0.0
        %430 = vmatpush2.xpose.msra.mxu0 0.0
        %431 = vmatprep.subr.mxu0 0.0
        %432 = vmatpush2.xpose.msra.mxu0 0.0
        %433 = vmatprep.subr.mxu0 0.0
        %434 = vmatpush2.xpose.msra.mxu0 0.0
        %435 = vmatprep.subr.mxu0 0.0
        %436 = vmatpush2.xpose.msra.mxu0 0.0
        %437 = vmatprep.subr.mxu0 0.0
        %438 = vmatpush2.xpose.msra.mxu0 0.0
        %439 = vmatprep.subr.mxu0 0.0
        %440 = vmatpush2.xpose.msra.mxu0 0.0
        %441 = vmatprep.subr.mxu0 0.0
        %442 = vmatpush2.xpose.msra.mxu0 0.0
        %443 = vmatprep.subr.mxu0 0.0
        %444 = vmatpush2.xpose.msra.mxu0 0.0
        %445 = vmatprep.subr.mxu0 0.0
        %446 = vmatpush2.xpose.msra.mxu0 0.0
        %447 = vmatprep.mubr.f32.mxu0 0.0
        %448 = vmatmul.mubr.f32.gmra.mxu0 %v378
        %v449 = vpop.f32.mrf.mxu0
        %v450 = vadd.f32 0.0, %v449
        %v451 = vpop.f32.mrf.mxu0
        %452 = vdwg.mxu0
        %v453 = vld [vmem:[#allocation2] sm:$0xff]
        %vm454 = vcmask 64512
        %v455 = vsel %vm454, %v450, -inf
        %456 = vmax.xlane.f32.xlu0 %v455
        %v457 = vpop.xlane.xlu0 %456
        %v458 = vmax.f32 %v453, %v457
        %v459 = vsub.f32 %v453, %v458
        %v460 = vmul.f32 %v459, 1.442695
        %v461 = vpow.pop %v460
        %463 = vset.pattern.permute.xlu0 0
        %464 = vperm.xlu0 %463, %v458
        %v465 = vpop.permute.xlu0 %464
        %v467 = vsub.f32 %v450, %v465
        %v468 = vmul.f32 %v467, 1.442695
        %v469 = vpow.pop %v468
        %v470 = vld [vmem:[#allocation3] sm:$0xff]
        %v471 = vmul.f32 %v461, %v470
        %v472 = vsel %vm454, %v469, 0.0
        %473 = vadd.xlane.f32.xlu0 %v472
        %v474 = vpop.xlane.xlu0 %473
        %v475 = vadd.f32 %v471, %v474
        %vm476 = vcmask 7168
        %477 = vst.msk [vmem:[#allocation3] sm:$0xff] %vm476, %v475
        %v478 = vld [vmem:[#allocation4] sm:$0xff]
        %480 = vset.pattern.permute.xlu0 0
        %481 = vperm.xlu0 %480, %v461
        %v482 = vpop.permute.xlu0 %481
        %v484 = vmul.f32 %v482, %v478
        %v486 = vsel %vm454, %v469, 0
        %488 = vmatprep.subr.mxu0 0.0
        %489 = vmatpush1.msra.mxu0 0.0
        %490 = vmatprep.subr.mxu0 0.0
        %491 = vmatpush1.msra.mxu0 0.0
        %492 = vmatprep.subr.mxu0 0.0
        %493 = vmatpush1.msra.mxu0 0.0
        %494 = vmatprep.subr.mxu0 0.0
        %495 = vmatpush1.msra.mxu0 0.0
        %496 = vmatprep.subr.mxu0 0.0
        %497 = vmatpush1.msra.mxu0 0.0
        %498 = vmatprep.subr.mxu0 0.0
        %499 = vmatpush1.msra.mxu0 0.0
        %500 = vmatprep.subr.mxu0 0.0
        %501 = vmatpush1.msra.mxu0 0.0
        %502 = vmatprep.subr.mxu0 0.0
        %503 = vmatpush1.msra.mxu0 0.0
        %504 = vmatprep.subr.mxu0 0.0
        %505 = vmatpush1.msra.mxu0 0.0
        %506 = vmatprep.subr.mxu0 0.0
        %507 = vmatpush1.msra.mxu0 0.0
        %508 = vmatprep.subr.mxu0 0.0
        %509 = vmatpush1.msra.mxu0 0.0
        %510 = vmatprep.subr.mxu0 0.0
        %511 = vmatpush1.msra.mxu0 0.0
        %512 = vmatprep.subr.mxu0 0.0
        %513 = vmatpush1.msra.mxu0 0.0
        %514 = vmatprep.subr.mxu0 0.0
        %515 = vmatpush1.msra.mxu0 0.0
        %516 = vmatprep.subr.mxu0 0.0
        %517 = vmatpush1.msra.mxu0 0.0
        %518 = vmatprep.subr.mxu0 0.0
        %519 = vmatpush1.msra.mxu0 %v375
        %520 = vmatprep.subr.mxu0 0.0
        %521 = vmatpush2.msra.mxu0 0.0
        %522 = vmatprep.subr.mxu0 0.0
        %523 = vmatpush2.msra.mxu0 0.0
        %524 = vmatprep.subr.mxu0 0.0
        %525 = vmatpush2.msra.mxu0 0.0
        %526 = vmatprep.subr.mxu0 0.0
        %527 = vmatpush2.msra.mxu0 0.0
        %528 = vmatprep.subr.mxu0 0.0
        %529 = vmatpush2.msra.mxu0 0.0
        %530 = vmatprep.subr.mxu0 0.0
        %531 = vmatpush2.msra.mxu0 0.0
        %532 = vmatprep.subr.mxu0 0.0
        %533 = vmatpush2.msra.mxu0 0.0
        %534 = vmatprep.subr.mxu0 0.0
        %535 = vmatpush2.msra.mxu0 0.0
        %536 = vmatprep.subr.mxu0 0.0
        %537 = vmatpush2.msra.mxu0 0.0
        %538 = vmatprep.subr.mxu0 0.0
        %539 = vmatpush2.msra.mxu0 0.0
        %540 = vmatprep.subr.mxu0 0.0
        %541 = vmatpush2.msra.mxu0 0.0
        %542 = vmatprep.subr.mxu0 0.0
        %543 = vmatpush2.msra.mxu0 0.0
        %544 = vmatprep.subr.mxu0 0.0
        %545 = vmatpush2.msra.mxu0 0.0
        %546 = vmatprep.subr.mxu0 0.0
        %547 = vmatpush2.msra.mxu0 0.0
        %548 = vmatprep.subr.mxu0 0.0
        %549 = vmatpush2.msra.mxu0 0.0
        %550 = vmatprep.subr.mxu0 0.0
        %551 = vmatpush2.msra.mxu0 0.0
        %552 = vmatprep.mubr.f32.mxu0 0.0
        %553 = vmatmul.mubr.f32.gmra.mxu0 %v486
        %v554 = vpop.f32.mrf.mxu0
        %v555 = vadd.f32 0.0, %v554
        %v556 = vpop.f32.mrf.mxu0
        %557 = vdwg.mxu0
        %v558 = vadd.f32 %v484, %v555
        %559 = vst.msk [vmem:[#allocation4] sm:$0xff] %vm376, %v558
        %560 = vst.msk [vmem:[#allocation2] sm:$0xff] %vm476, %v458
        // Predicated region
        $region49: #{attention_pallas.3} parent=39 // pred_check
          %p561 = pneg %p358
        $region50: #{attention_pallas.3} parent=39 // pred_check_branch
          %563 = sbr.rel (%p561) target = $region52
        $region51: #{attention_pallas.3} parent=39 // pred_region
          %v564 = vld [vmem:[#allocation3] sm:$0xff]
          %v565 = vrcp.pop %v564
          %v566 = vld [vmem:[#allocation4] sm:$0xff]
          %568 = vset.pattern.permute.xlu0 0
          %569 = vperm.xlu0 %568, %v565
          %v570 = vpop.permute.xlu0 %569
          %v572 = vmul.f32 %v566, %v570
          %v573 = vld [vmem:[#allocation5] sm:$0xff]
          %s574 = smul.u32 %s27, 4
          %s575 = scalar_lea.vmem %s3, %s574
          %v576 = vld [vmem:[%s575] sm:$0xf]
          %v578 = vsel %vm376, %v572, 0
          %vm580 = vcmask 1043456
          %v582 = vsel %vm580, %v576, 0
          %584 = vmatprep.subr.mxu0 0.0
          %585 = vmatpush1.msra.mxu0 0.0
          %586 = vmatprep.subr.mxu0 0.0
          %587 = vmatpush1.msra.mxu0 0.0
          %588 = vmatprep.subr.mxu0 0.0
          %589 = vmatpush1.msra.mxu0 0.0
          %590 = vmatprep.subr.mxu0 0.0
          %591 = vmatpush1.msra.mxu0 0.0
          %592 = vmatprep.subr.mxu0 0.0
          %593 = vmatpush1.msra.mxu0 0.0
          %594 = vmatprep.subr.mxu0 0.0
          %595 = vmatpush1.msra.mxu0 0.0
          %596 = vmatprep.subr.mxu0 0.0
          %597 = vmatpush1.msra.mxu0 0.0
          %598 = vmatprep.subr.mxu0 0.0
          %599 = vmatpush1.msra.mxu0 0.0
          %600 = vmatprep.subr.mxu0 0.0
          %601 = vmatpush1.msra.mxu0 0.0
          %602 = vmatprep.subr.mxu0 0.0
          %603 = vmatpush1.msra.mxu0 0.0
          %604 = vmatprep.subr.mxu0 0.0
          %605 = vmatpush1.msra.mxu0 0.0
          %606 = vmatprep.subr.mxu0 0.0
          %607 = vmatpush1.msra.mxu0 0.0
          %608 = vmatprep.subr.mxu0 0.0
          %609 = vmatpush1.msra.mxu0 0.0
          %610 = vmatprep.subr.mxu0 0.0
          %611 = vmatpush1.msra.mxu0 0.0
          %612 = vmatprep.subr.mxu0 0.0
          %613 = vmatpush1.msra.mxu0 0.0
          %614 = vmatprep.subr.mxu0 0.0
          %615 = vmatpush1.msra.mxu0 %v582
          %616 = vmatprep.subr.mxu0 0.0
          %617 = vmatpush2.msra.mxu0 0.0
          %618 = vmatprep.subr.mxu0 0.0
          %619 = vmatpush2.msra.mxu0 0.0
          %620 = vmatprep.subr.mxu0 0.0
          %621 = vmatpush2.msra.mxu0 0.0
          %622 = vmatprep.subr.mxu0 0.0
          %623 = vmatpush2.msra.mxu0 0.0
          %624 = vmatprep.subr.mxu0 0.0
          %625 = vmatpush2.msra.mxu0 0.0
          %626 = vmatprep.subr.mxu0 0.0
          %627 = vmatpush2.msra.mxu0 0.0
          %628 = vmatprep.subr.mxu0 0.0
          %629 = vmatpush2.msra.mxu0 0.0
          %630 = vmatprep.subr.mxu0 0.0
          %631 = vmatpush2.msra.mxu0 0.0
          %632 = vmatprep.subr.mxu0 0.0
          %633 = vmatpush2.msra.mxu0 0.0
          %634 = vmatprep.subr.mxu0 0.0
          %635 = vmatpush2.msra.mxu0 0.0
          %636 = vmatprep.subr.mxu0 0.0
          %637 = vmatpush2.msra.mxu0 0.0
          %638 = vmatprep.subr.mxu0 0.0
          %639 = vmatpush2.msra.mxu0 0.0
          %640 = vmatprep.subr.mxu0 0.0
          %641 = vmatpush2.msra.mxu0 0.0
          %642 = vmatprep.subr.mxu0 0.0
          %643 = vmatpush2.msra.mxu0 0.0
          %644 = vmatprep.subr.mxu0 0.0
          %645 = vmatpush2.msra.mxu0 0.0
          %646 = vmatprep.subr.mxu0 0.0
          %647 = vmatpush2.msra.mxu0 0.0
          %648 = vmatprep.mubr.f32.mxu0 0.0
          %649 = vmatmul.mubr.f32.gmra.mxu0 %v578
          %v650 = vpop.f32.mrf.mxu0
          %v651 = vadd.f32 0.0, %v650
          %v652 = vpop.f32.mrf.mxu0
          %653 = vdwg.mxu0
          %v654 = vadd.f32 %v573, %v651
          %vm655 = vcmask 261120
          %656 = vst.msk [vmem:[#allocation5] sm:$0xff] %vm655, %v654
        $region52: #{attention_pallas.3} parent=39 // pred_fallthru
          _
        %p657 = scmp.eq.s32.totalorder %s27, 7
        %p658 = pnand %p657, %p358
        %p659 = pneg %p658
        // Predicated region
        $region53: #{attention_pallas.3} parent=39 // pred_check
          _
        $region54: #{attention_pallas.3} parent=39 // pred_check_branch
          %661 = sbr.rel (%p658) target = $region56
        $region55: #{attention_pallas.3} parent=39 // pred_region
          %v662 = vld [vmem:[#allocation5] sm:$0xff]
          %v663 = vld [vmem:[%s4] sm:$0x1]
          %v665 = vlaneseq
          %v666 = vshrl.u32 %v665, 7
          %v667 = vsub.s32 0, %v666
          %v668 = vrot.slane %v663, %v667
          %v670 = vadd.f32 %v662, %v668
          %vm671 = vcmask 261120
          %672 = vst.msk [vmem:[%s323] sm:$0xff] %vm671, %v670
        $region56: #{attention_pallas.3} parent=39 // pred_fallthru
          _
        %s673 = sand.u32 %s187, 1
        %s674 = scalar_lea.sflag [#allocation7], %s673
        %s675 = sand.u32 %s187, 1
        %s676 = smul.addr %s675, 8
        %s677 = scalar_lea.vmem [#allocation6], %s676
        // Predicated region
        $region57: #{attention_pallas.3} parent=39 // pred_check
          %p678 = pneg %p197
        $region58: #{attention_pallas.3} parent=39 // pred_check_branch
          %680 = sbr.rel (%p678) target = $region60
        $region59: #{attention_pallas.3} parent=39 // pred_region
          %s682 = ssub.s32 128, 128
          %683 = vsyncadd %s674, %s682
          %s684 = sadd.s32 %s26, %s25
          %s685 = smul.addr %s684, 128
          %s686 = scalar_lea.hbm %s5, %s685
          %s688 = sshll.u32 %s677, 4
          %s689 = int_to_ptr.vmem [resolvable:$true] %s688
          %691 = dma.vmem_to_hbm [thread:$0]  %s689, 128, %s686, %s674
        $region60: #{attention_pallas.3} parent=39 // pred_fallthru
          _
      $region40: #{attention_pallas.3} parent=5 // pred_fallthru
        _
      %p692 = scmp.le.s32.totalorder 2, %s14
      // Predicated region
      $region61: #{attention_pallas.3} parent=5 // pred_check
        %p693 = pneg %p692
      $region62: #{attention_pallas.3} parent=5 // pred_check_branch
        %695 = sbr.rel (%p693) target = $region64
      $region63: #{attention_pallas.3} parent=5 // pred_region
        %s696 = ssub.s32 %s14, 2
        // Predicated region
        $region65: #{attention_pallas.3} parent=63 // pred_check
          %p697 = pneg %p203
        $region66: #{attention_pallas.3} parent=63 // pred_check_branch
          %699 = sbr.rel (%p697) target = $region68
        $region67: #{attention_pallas.3} parent=63 // pred_region
          %s700 = sand.u32 %s188, 1
          %s701 = scalar_lea.sflag [#allocation7], %s700
          %s702 = sand.u32 %s188, 1
          %s703 = smul.addr %s702, 8
          %s704 = scalar_lea.vmem [#allocation6], %s703
          %705 = dma.done %s701, 128
        $region68: #{attention_pallas.3} parent=63 // pred_fallthru
          _
      $region64: #{attention_pallas.3} parent=5 // pred_fallthru
        _
    $region6: #{attention_pallas.3} parent=1 // loop_footer
      %s18 = sadd.s32 1, %s14
    $region7: #{attention_pallas.3} parent=1 // loop_footer_branch
      %13 = sbr.rel target = $region3
    $region8: #{attention_pallas.3} parent=1 // loop_exit
      _
    %706 = vsyncpa [#allocation7], 1
    %s707 = scalar_lea.sflag [#allocation7], 1
    %708 = vsyncpa %s707, 1

</llo_original>
